<compile_context>
chip_gen: v5e
topology: v5e:2x2
jax: 0.10.0
libtpu: 0.0.40
codegen_flags: <defaults>
</compile_context>

<pallas_src>
import functools

import jax
import jax.numpy as jnp
import numpy as np
from jax.experimental import pallas as pl
from jax.experimental.pallas import tpu as pltpu


# ----------------------------------------------------------------------------
# Pallas kernel: one grid step = one batch element, fully fused block.
# All activations live in a (D*H, W*C) layout (lane axis = W*C, >= 64 lanes).
# ----------------------------------------------------------------------------
def bottleneck_kernel(x_ref, w1_ref, b1_ref, w2_ref, b2_ref, w3_ref, b3_ref,
                      o_ref, pad_ref):
    D = pad_ref.shape[0] - 2
    H = pad_ref.shape[1] - 2
    wcm = pad_ref.shape[2]               # W * Cmid
    DH = D * H
    cdt = w1_ref.dtype                   # matmul operand dtype (fp32 or bf16)

    # ---- conv1 (1x1x1, BN1 scale pre-folded, W-block-diagonal weight) ------
    h1 = jnp.dot(x_ref[0].astype(cdt), w1_ref[...],
                 preferred_element_type=jnp.float32)
    h1 = jnp.maximum(h1 + b1_ref[...], 0.0)                 # (DH, W*Cmid) f32

    # ---- stage into the D/H-padded scratch (W needs no halo: the conv2 band
    #      weight already encodes the zero padding along W) --------------------
    pad_ref[0:1, :, :] = jnp.zeros((1, H + 2, wcm), jnp.float32)
    pad_ref[D + 1:D + 2, :, :] = jnp.zeros((1, H + 2, wcm), jnp.float32)
    pad_ref[1:D + 1, 0:1, :] = jnp.zeros((D, 1, wcm), jnp.float32)
    pad_ref[1:D + 1, H + 1:H + 2, :] = jnp.zeros((D, 1, wcm), jnp.float32)
    pad_ref[1:D + 1, 1:H + 1, :] = h1.reshape(D, H, wcm)

    # ---- conv2 (3x3x3 grouped): 9 (kd,kh) matmuls; each (W*Cmid, W*Cmid)
    #      band weight folds the kw taps, the group structure and BN2 scale --
    acc = None
    for kd in range(3):
        for kh in range(3):
            a = pad_ref[kd:kd + D, kh:kh + H, :].reshape(DH, wcm)
            p = jnp.dot(a.astype(cdt), w2_ref[kd * 3 + kh],
                        preferred_element_type=jnp.float32)
            acc = p if acc is None else acc + p
    h2 = jnp.maximum(acc + b2_ref[...], 0.0)                # (DH, W*Cmid) f32

    # ---- conv3 (1x1x1, BN3 scale pre-folded) + bias + residual + ReLU ------
    h3 = jnp.dot(h2.astype(cdt), w3_ref[...],
                 preferred_element_type=jnp.float32)        # (DH, W*Cout)
    # residual re-read here (input block is VMEM-resident), not carried live.
    o_ref[0] = jnp.maximum(h3 + b3_ref[...] + x_ref[0], 0.0)


# ----------------------------------------------------------------------------
# Wrapper
# ----------------------------------------------------------------------------
def resnext_bottleneck(x, w1_big, b1, w2_band, b2, w3_big, b3,
                       compute_dtype=jnp.float32):
    """x: (N, D, H, W, Cin) float32 (NDHWC).  Returns (N, D, H, W, Cout)."""
    N, D, H, W, Cin = x.shape
    WCin = W * Cin
    WCmid = w1_big.shape[1]
    Cmid = WCmid // W
    WCout = w3_big.shape[1]
    Cout = WCout // W
    DH = D * H

    x2 = x.reshape(N, DH, WCin)                  # free row-major reshape
    w1c = w1_big.astype(compute_dtype)
    w2c = w2_band.astype(compute_dtype)
    w3c = w3_big.astype(compute_dtype)

    out2 = pl.pallas_call(
        bottleneck_kernel,
        out_shape=jax.ShapeDtypeStruct((N, DH, WCout), jnp.float32),
        grid_spec=pltpu.PrefetchScalarGridSpec(
            num_scalar_prefetch=0,
            grid=(N,),
            in_specs=[
                pl.BlockSpec((1, DH, WCin), lambda n: (n, 0, 0)),
                pl.BlockSpec((WCin, WCmid), lambda n: (0, 0)),
                pl.BlockSpec((1, WCmid), lambda n: (0, 0)),
                pl.BlockSpec((9, WCmid, WCmid), lambda n: (0, 0, 0)),
                pl.BlockSpec((1, WCmid), lambda n: (0, 0)),
                pl.BlockSpec((WCmid, WCout), lambda n: (0, 0)),
                pl.BlockSpec((1, WCout), lambda n: (0, 0)),
            ],
            out_specs=pl.BlockSpec((1, DH, WCout), lambda n: (n, 0, 0)),
            scratch_shapes=[
                pltpu.VMEM((D + 2, H + 2, W * Cmid), jnp.float32),
            ],
        ),
        compiler_params=pltpu.CompilerParams(
            dimension_semantics=("parallel",)),
    )(x2, w1c, b1, w2c, b2, w3c, b3)
    return out2.reshape(N, D, H, W, Cout)


# ----------------------------------------------------------------------------
# Parameter construction (deterministic, synthetic) + pure-JAX reference
# ----------------------------------------------------------------------------
def make_params(key, inplanes, planes, cardinality):
    expansion = 2
    mid = cardinality * int(planes / 32)
    out_ch = planes * expansion
    ks = jax.random.split(key, 6)

    def bn_params(k, c, eps=1e-5):
        k1, k2, k3, k4 = jax.random.split(k, 4)
        gamma = jax.random.uniform(k1, (c,), minval=0.5, maxval=1.5)
        beta = 0.1 * jax.random.normal(k2, (c,))
        mean = 0.1 * jax.random.normal(k3, (c,))
        var = jax.random.uniform(k4, (c,), minval=0.5, maxval=1.5)
        scale = gamma / jnp.sqrt(var + eps)
        bias = beta - mean * scale
        return scale, bias

    # conv1 weight stored as (Cin, Cmid) so that x @ w1 == 1x1x1 conv.
    w1 = 0.1 * jax.random.normal(ks[0], (inplanes, mid), jnp.float32)
    s1, b1 = bn_params(ks[1], mid)

    # conv2 grouped weight in torch layout (Cout, Cin_per_group, 3, 3, 3),
    # expanded to a dense block-diagonal (3, 3, 3, Cin, Cout) weight.
    cg = mid // cardinality
    w2_torch = np.asarray(
        0.1 * jax.random.normal(ks[2], (mid, cg, 3, 3, 3), jnp.float32))
    w2_dense = np.zeros((3, 3, 3, mid, mid), np.float32)
    for g in range(cardinality):
        blk = w2_torch[g * cg:(g + 1) * cg]            # (cg_out, cg_in, 3,3,3)
        blk_t = np.transpose(blk, (2, 3, 4, 1, 0))     # (3,3,3, cg_in, cg_out)
        w2_dense[:, :, :, g * cg:(g + 1) * cg, g * cg:(g + 1) * cg] = blk_t
    w2_dense = jnp.asarray(w2_dense)
    s2, b2 = bn_params(ks[3], mid)

    w3 = 0.1 * jax.random.normal(ks[4], (mid, out_ch), jnp.float32)
    s3, b3 = bn_params(ks[5], out_ch)

    return w1, s1, b1, w2_dense, s2, b2, w3, s3, b3


def build_kernel_params(w1, s1, b1, w2_dense, s2, b2, w3, s3, b3, W):
    """Fold BN scales into the conv weights and expand them to the flattened
    (W*C_in, W*C_out) block-diagonal / band layout used by the kernel."""
    w1 = np.asarray(w1); s1 = np.asarray(s1); b1 = np.asarray(b1)
    w2 = np.asarray(w2_dense); s2 = np.asarray(s2); b2 = np.asarray(b2)
    w3 = np.asarray(w3); s3 = np.asarray(s3); b3 = np.asarray(b3)
    Cin, Cmid = w1.shape
    Cout = w3.shape[1]

    # Fold BN scale into the conv output channels; bias stays separate.
    w1f = (w1 * s1[None, :]).astype(np.float32)
    w2f = (w2 * s2[None, None, None, None, :]).astype(np.float32)
    w3f = (w3 * s3[None, :]).astype(np.float32)

    # conv1 / conv3: block-diagonal over the W positions.
    w1_big = np.zeros((W * Cin, W * Cmid), np.float32)
    w3_big = np.zeros((W * Cmid, W * Cout), np.float32)
    for w in range(W):
        w1_big[w * Cin:(w + 1) * Cin, w * Cmid:(w + 1) * Cmid] = w1f
        w3_big[w * Cmid:(w + 1) * Cmid, w * Cout:(w + 1) * Cout] = w3f

    # conv2: one (W*Cmid, W*Cmid) band weight per (kd, kh).  The band folds
    # the three kw taps and the zero padding at the W boundary; w2f is
    # already block-diagonal over the groups.
    w2_band = np.zeros((9, W * Cmid, W * Cmid), np.float32)
    for kd in range(3):
        for kh in range(3):
            t = kd * 3 + kh
            for wo in range(W):
                for kw in range(3):
                    wi = wo + kw - 1
                    if 0 <= wi < W:
                        w2_band[t,
                                wi * Cmid:(wi + 1) * Cmid,
                                wo * Cmid:(wo + 1) * Cmid] = w2f[kd, kh, kw]

    b1_t = np.tile(b1.astype(np.float32), W)[None, :]   # (1, W*Cmid)
    b2_t = np.tile(b2.astype(np.float32), W)[None, :]   # (1, W*Cmid)
    b3_t = np.tile(b3.astype(np.float32), W)[None, :]   # (1, W*Cout)

    return (jnp.asarray(w1_big), jnp.asarray(b1_t),
            jnp.asarray(w2_band), jnp.asarray(b2_t),
            jnp.asarray(w3_big), jnp.asarray(b3_t))


def reference_forward(x, w1, s1, b1, w2_dense, s2, b2, w3, s3, b3):
    """Pure-JAX NDHWC reference of the module forward (eval-mode BN)."""
    N, D, H, W, Cin = x.shape
    hi = jax.lax.Precision.HIGHEST
    h = jnp.einsum('ndhwc,ck->ndhwk', x, w1, precision=hi)
    h = jnp.maximum(h * s1 + b1, 0.0)
    hp = jnp.pad(h, ((0, 0), (1, 1), (1, 1), (1, 1), (0, 0)))
    acc = jnp.zeros(h.shape, jnp.float32)
    for kd in range(3):
        for kh in range(3):
            for kw in range(3):
                acc = acc + jnp.einsum(
                    'ndhwc,ck->ndhwk',
                    hp[:, kd:kd + D, kh:kh + H, kw:kw + W, :],
                    w2_dense[kd, kh, kw], precision=hi)
    h2 = jnp.maximum(acc * s2 + b2, 0.0)
    h3 = jnp.einsum('ndhwc,ck->ndhwk', h2, w3, precision=hi)
    return jnp.maximum(h3 * s3 + b3 + x, 0.0)


# ----------------------------------------------------------------------------
if __name__ == "__main__":
    # Module hyper-parameters (stride=1, downsample=None).
    inplanes, planes, cardinality = 128, 64, 4
    N, D, H, W = 2, 4, 8, 8

    key = jax.random.PRNGKey(0)
    kx, kp = jax.random.split(key)

    # PyTorch input would be NCDHW (2, 128, 4, 8, 8); the kernel uses NDHWC.
    x = jax.random.normal(kx, (N, D, H, W, inplanes), jnp.float32)

    (w1, s1, b1, w2_dense, s2, b2, w3, s3, b3) = make_params(
        kp, inplanes, planes, cardinality)
    kparams = build_kernel_params(w1, s1, b1, w2_dense, s2, b2,
                                  w3, s3, b3, W)

    out = jax.block_until_ready(resnext_bottleneck(x, *kparams))

    ref = jax.block_until_ready(
        reference_forward(x, w1, s1, b1, w2_dense, s2, b2, w3, s3, b3))

    # All-fp32 path: tight tolerance (the previous 2e-2 was too loose).
    np.testing.assert_allclose(np.asarray(out), np.asarray(ref),
                               rtol=1e-4, atol=1e-4)

    print("KERNEL_OK")
</pallas_src>

<mosaic_0001>
module attributes {stable_mosaic.version = 11 : i64} {
  func.func @bottleneck_kernel(%arg0: i32, %arg1: memref<1x32x1024xf32, #tpu.memory_space<vmem>>, %arg2: memref<1024x64xf32, #tpu.memory_space<vmem>>, %arg3: memref<1x64xf32, #tpu.memory_space<vmem>>, %arg4: memref<9x64x64xf32, #tpu.memory_space<vmem>>, %arg5: memref<1x64xf32, #tpu.memory_space<vmem>>, %arg6: memref<64x1024xf32, #tpu.memory_space<vmem>>, %arg7: memref<1x1024xf32, #tpu.memory_space<vmem>>, %arg8: memref<1x32x1024xf32, #tpu.memory_space<vmem>>, %arg9: memref<6x10x64xf32, #tpu.memory_space<vmem>>) attributes {dimension_semantics = [#tpu.dimension_semantics<parallel>], iteration_bounds = array<i64: 2>, scalar_prefetch = 0 : i64, scratch_operands = 1 : i64, tpu.core_type = #tpu.core_type<tc>, window_params = [{transform_indices = @transform_0, window_bounds = array<i64: 1, 32, 1024>}, {pipeline_mode = #tpu.pipeline_mode<synchronous>, transform_indices = @transform_1, window_bounds = array<i64: 1024, 64>}, {pipeline_mode = #tpu.pipeline_mode<synchronous>, transform_indices = @transform_2, window_bounds = array<i64: 1, 64>}, {pipeline_mode = #tpu.pipeline_mode<synchronous>, transform_indices = @transform_3, window_bounds = array<i64: 9, 64, 64>}, {pipeline_mode = #tpu.pipeline_mode<synchronous>, transform_indices = @transform_4, window_bounds = array<i64: 1, 64>}, {pipeline_mode = #tpu.pipeline_mode<synchronous>, transform_indices = @transform_5, window_bounds = array<i64: 64, 1024>}, {pipeline_mode = #tpu.pipeline_mode<synchronous>, transform_indices = @transform_6, window_bounds = array<i64: 1, 1024>}, {transform_indices = @transform_7, window_bounds = array<i64: 1, 32, 1024>}]} {
    %c0 = arith.constant 0 : index
    %c0_0 = arith.constant 0 : index
    %c0_1 = arith.constant 0 : index
    %0 = vector.load %arg1[%c0, %c0_0, %c0_1] : memref<1x32x1024xf32, #tpu.memory_space<vmem>>, vector<1x32x1024xf32>
    %1 = vector.shape_cast %0 : vector<1x32x1024xf32> to vector<32x1024xf32>
    %c0_2 = arith.constant 0 : index
    %c0_3 = arith.constant 0 : index
    %2 = vector.load %arg2[%c0_2, %c0_3] : memref<1024x64xf32, #tpu.memory_space<vmem>>, vector<1024x64xf32>
    %cst = arith.constant dense<0.000000e+00> : vector<32x64xf32>
    %3 = tpu.matmul %1, %2, %cst {dimension_numbers = #tpu.dot_dimension_numbers<[1], [0], [0], [1], [0, 0, 1, 1], [], []>} : vector<32x1024xf32>, vector<1024x64xf32>, vector<32x64xf32> -> vector<32x64xf32>
    %c0_4 = arith.constant 0 : index
    %c0_5 = arith.constant 0 : index
    %4 = vector.load %arg3[%c0_4, %c0_5] : memref<1x64xf32, #tpu.memory_space<vmem>>, vector<1x64xf32>
    %5 = vector.broadcast %4 : vector<1x64xf32> to vector<32x64xf32>
    %6 = arith.addf %3, %5 : vector<32x64xf32>
    %cst_6 = arith.constant 0.000000e+00 : f32
    %7 = vector.broadcast %cst_6 : f32 to vector<32x64xf32>
    %8 = arith.maximumf %6, %7 : vector<32x64xf32>
    %cst_7 = arith.constant 0.000000e+00 : f32
    %9 = vector.broadcast %cst_7 : f32 to vector<1x10x64xf32>
    %c0_8 = arith.constant 0 : index
    %c0_9 = arith.constant 0 : index
    %c0_10 = arith.constant 0 : index
    %10 = vector.load %arg9[%c0_8, %c0_9, %c0_10] : memref<6x10x64xf32, #tpu.memory_space<vmem>>, vector<1x10x64xf32>
    tpu.vector_store %arg9[%c0_8, %c0_9, %c0_10], %9 {strides = array<i32>} : memref<6x10x64xf32, #tpu.memory_space<vmem>>, vector<1x10x64xf32>,
    %cst_11 = arith.constant 0.000000e+00 : f32
    %11 = vector.broadcast %cst_11 : f32 to vector<1x10x64xf32>
    %c5 = arith.constant 5 : index
    %c0_12 = arith.constant 0 : index
    %c0_13 = arith.constant 0 : index
    %12 = vector.load %arg9[%c5, %c0_12, %c0_13] : memref<6x10x64xf32, #tpu.memory_space<vmem>>, vector<1x10x64xf32>
    tpu.vector_store %arg9[%c5, %c0_12, %c0_13], %11 {strides = array<i32>} : memref<6x10x64xf32, #tpu.memory_space<vmem>>, vector<1x10x64xf32>,
    %cst_14 = arith.constant 0.000000e+00 : f32
    %13 = vector.broadcast %cst_14 : f32 to vector<4x1x64xf32>
    %c1 = arith.constant 1 : index
    %c0_15 = arith.constant 0 : index
    %c0_16 = arith.constant 0 : index
    %14 = vector.load %arg9[%c1, %c0_15, %c0_16] : memref<6x10x64xf32, #tpu.memory_space<vmem>>, vector<4x1x64xf32>
    tpu.vector_store %arg9[%c1, %c0_15, %c0_16], %13 {strides = array<i32>} : memref<6x10x64xf32, #tpu.memory_space<vmem>>, vector<4x1x64xf32>,
    %cst_17 = arith.constant 0.000000e+00 : f32
    %15 = vector.broadcast %cst_17 : f32 to vector<4x1x64xf32>
    %c1_18 = arith.constant 1 : index
    %c9 = arith.constant 9 : index
    %c0_19 = arith.constant 0 : index
    %16 = vector.load %arg9[%c1_18, %c9, %c0_19] : memref<6x10x64xf32, #tpu.memory_space<vmem>>, vector<4x1x64xf32>
    tpu.vector_store %arg9[%c1_18, %c9, %c0_19], %15 {strides = array<i32>} : memref<6x10x64xf32, #tpu.memory_space<vmem>>, vector<4x1x64xf32>,
    %17 = vector.shape_cast %8 : vector<32x64xf32> to vector<4x8x64xf32>
    %c1_20 = arith.constant 1 : index
    %c1_21 = arith.constant 1 : index
    %c0_22 = arith.constant 0 : index
    %18 = vector.load %arg9[%c1_20, %c1_21, %c0_22] : memref<6x10x64xf32, #tpu.memory_space<vmem>>, vector<4x8x64xf32>
    tpu.vector_store %arg9[%c1_20, %c1_21, %c0_22], %17 {strides = array<i32>} : memref<6x10x64xf32, #tpu.memory_space<vmem>>, vector<4x8x64xf32>,
    %c0_23 = arith.constant 0 : index
    %c0_24 = arith.constant 0 : index
    %c0_25 = arith.constant 0 : index
    %19 = vector.load %arg9[%c0_23, %c0_24, %c0_25] : memref<6x10x64xf32, #tpu.memory_space<vmem>>, vector<4x8x64xf32>
    %20 = vector.shape_cast %19 : vector<4x8x64xf32> to vector<32x64xf32>
    %c0_26 = arith.constant 0 : index
    %c0_27 = arith.constant 0 : index
    %c0_28 = arith.constant 0 : index
    %21 = vector.load %arg4[%c0_26, %c0_27, %c0_28] : memref<9x64x64xf32, #tpu.memory_space<vmem>>, vector<1x64x64xf32>
    %22 = vector.shape_cast %21 : vector<1x64x64xf32> to vector<64x64xf32>
    %cst_29 = arith.constant dense<0.000000e+00> : vector<32x64xf32>
    %23 = tpu.matmul %20, %22, %cst_29 {dimension_numbers = #tpu.dot_dimension_numbers<[1], [0], [0], [1], [0, 0, 1, 1], [], []>} : vector<32x64xf32>, vector<64x64xf32>, vector<32x64xf32> -> vector<32x64xf32>
    %c0_30 = arith.constant 0 : index
    %c1_31 = arith.constant 1 : index
    %c0_32 = arith.constant 0 : index
    %24 = vector.load %arg9[%c0_30, %c1_31, %c0_32] : memref<6x10x64xf32, #tpu.memory_space<vmem>>, vector<4x8x64xf32>
    %25 = vector.shape_cast %24 : vector<4x8x64xf32> to vector<32x64xf32>
    %c1_33 = arith.constant 1 : index
    %c0_34 = arith.constant 0 : index
    %c0_35 = arith.constant 0 : index
    %26 = vector.load %arg4[%c1_33, %c0_34, %c0_35] : memref<9x64x64xf32, #tpu.memory_space<vmem>>, vector<1x64x64xf32>
    %27 = vector.shape_cast %26 : vector<1x64x64xf32> to vector<64x64xf32>
    %cst_36 = arith.constant dense<0.000000e+00> : vector<32x64xf32>
    %28 = tpu.matmul %25, %27, %cst_36 {dimension_numbers = #tpu.dot_dimension_numbers<[1], [0], [0], [1], [0, 0, 1, 1], [], []>} : vector<32x64xf32>, vector<64x64xf32>, vector<32x64xf32> -> vector<32x64xf32>
    %29 = arith.addf %23, %28 : vector<32x64xf32>
    %c0_37 = arith.constant 0 : index
    %c2 = arith.constant 2 : index
    %c0_38 = arith.constant 0 : index
    %30 = vector.load %arg9[%c0_37, %c2, %c0_38] : memref<6x10x64xf32, #tpu.memory_space<vmem>>, vector<4x8x64xf32>
    %31 = vector.shape_cast %30 : vector<4x8x64xf32> to vector<32x64xf32>
    %c2_39 = arith.constant 2 : index
    %c0_40 = arith.constant 0 : index
    %c0_41 = arith.constant 0 : index
    %32 = vector.load %arg4[%c2_39, %c0_40, %c0_41] : memref<9x64x64xf32, #tpu.memory_space<vmem>>, vector<1x64x64xf32>
    %33 = vector.shape_cast %32 : vector<1x64x64xf32> to vector<64x64xf32>
    %cst_42 = arith.constant dense<0.000000e+00> : vector<32x64xf32>
    %34 = tpu.matmul %31, %33, %cst_42 {dimension_numbers = #tpu.dot_dimension_numbers<[1], [0], [0], [1], [0, 0, 1, 1], [], []>} : vector<32x64xf32>, vector<64x64xf32>, vector<32x64xf32> -> vector<32x64xf32>
    %35 = arith.addf %29, %34 : vector<32x64xf32>
    %c1_43 = arith.constant 1 : index
    %c0_44 = arith.constant 0 : index
    %c0_45 = arith.constant 0 : index
    %36 = vector.load %arg9[%c1_43, %c0_44, %c0_45] : memref<6x10x64xf32, #tpu.memory_space<vmem>>, vector<4x8x64xf32>
    %37 = vector.shape_cast %36 : vector<4x8x64xf32> to vector<32x64xf32>
    %c3 = arith.constant 3 : index
    %c0_46 = arith.constant 0 : index
    %c0_47 = arith.constant 0 : index
    %38 = vector.load %arg4[%c3, %c0_46, %c0_47] : memref<9x64x64xf32, #tpu.memory_space<vmem>>, vector<1x64x64xf32>
    %39 = vector.shape_cast %38 : vector<1x64x64xf32> to vector<64x64xf32>
    %cst_48 = arith.constant dense<0.000000e+00> : vector<32x64xf32>
    %40 = tpu.matmul %37, %39, %cst_48 {dimension_numbers = #tpu.dot_dimension_numbers<[1], [0], [0], [1], [0, 0, 1, 1], [], []>} : vector<32x64xf32>, vector<64x64xf32>, vector<32x64xf32> -> vector<32x64xf32>
    %41 = arith.addf %35, %40 : vector<32x64xf32>
    %c1_49 = arith.constant 1 : index
    %c1_50 = arith.constant 1 : index
    %c0_51 = arith.constant 0 : index
    %42 = vector.load %arg9[%c1_49, %c1_50, %c0_51] : memref<6x10x64xf32, #tpu.memory_space<vmem>>, vector<4x8x64xf32>
    %43 = vector.shape_cast %42 : vector<4x8x64xf32> to vector<32x64xf32>
    %c4 = arith.constant 4 : index
    %c0_52 = arith.constant 0 : index
    %c0_53 = arith.constant 0 : index
    %44 = vector.load %arg4[%c4, %c0_52, %c0_53] : memref<9x64x64xf32, #tpu.memory_space<vmem>>, vector<1x64x64xf32>
    %45 = vector.shape_cast %44 : vector<1x64x64xf32> to vector<64x64xf32>
    %cst_54 = arith.constant dense<0.000000e+00> : vector<32x64xf32>
    %46 = tpu.matmul %43, %45, %cst_54 {dimension_numbers = #tpu.dot_dimension_numbers<[1], [0], [0], [1], [0, 0, 1, 1], [], []>} : vector<32x64xf32>, vector<64x64xf32>, vector<32x64xf32> -> vector<32x64xf32>
    %47 = arith.addf %41, %46 : vector<32x64xf32>
    %c1_55 = arith.constant 1 : index
    %c2_56 = arith.constant 2 : index
    %c0_57 = arith.constant 0 : index
    %48 = vector.load %arg9[%c1_55, %c2_56, %c0_57] : memref<6x10x64xf32, #tpu.memory_space<vmem>>, vector<4x8x64xf32>
    %49 = vector.shape_cast %48 : vector<4x8x64xf32> to vector<32x64xf32>
    %c5_58 = arith.constant 5 : index
    %c0_59 = arith.constant 0 : index
    %c0_60 = arith.constant 0 : index
    %50 = vector.load %arg4[%c5_58, %c0_59, %c0_60] : memref<9x64x64xf32, #tpu.memory_space<vmem>>, vector<1x64x64xf32>
    %51 = vector.shape_cast %50 : vector<1x64x64xf32> to vector<64x64xf32>
    %cst_61 = arith.constant dense<0.000000e+00> : vector<32x64xf32>
    %52 = tpu.matmul %49, %51, %cst_61 {dimension_numbers = #tpu.dot_dimension_numbers<[1], [0], [0], [1], [0, 0, 1, 1], [], []>} : vector<32x64xf32>, vector<64x64xf32>, vector<32x64xf32> -> vector<32x64xf32>
    %53 = arith.addf %47, %52 : vector<32x64xf32>
    %c2_62 = arith.constant 2 : index
    %c0_63 = arith.constant 0 : index
    %c0_64 = arith.constant 0 : index
    %54 = vector.load %arg9[%c2_62, %c0_63, %c0_64] : memref<6x10x64xf32, #tpu.memory_space<vmem>>, vector<4x8x64xf32>
    %55 = vector.shape_cast %54 : vector<4x8x64xf32> to vector<32x64xf32>
    %c6 = arith.constant 6 : index
    %c0_65 = arith.constant 0 : index
    %c0_66 = arith.constant 0 : index
    %56 = vector.load %arg4[%c6, %c0_65, %c0_66] : memref<9x64x64xf32, #tpu.memory_space<vmem>>, vector<1x64x64xf32>
    %57 = vector.shape_cast %56 : vector<1x64x64xf32> to vector<64x64xf32>
    %cst_67 = arith.constant dense<0.000000e+00> : vector<32x64xf32>
    %58 = tpu.matmul %55, %57, %cst_67 {dimension_numbers = #tpu.dot_dimension_numbers<[1], [0], [0], [1], [0, 0, 1, 1], [], []>} : vector<32x64xf32>, vector<64x64xf32>, vector<32x64xf32> -> vector<32x64xf32>
    %59 = arith.addf %53, %58 : vector<32x64xf32>
    %c2_68 = arith.constant 2 : index
    %c1_69 = arith.constant 1 : index
    %c0_70 = arith.constant 0 : index
    %60 = vector.load %arg9[%c2_68, %c1_69, %c0_70] : memref<6x10x64xf32, #tpu.memory_space<vmem>>, vector<4x8x64xf32>
    %61 = vector.shape_cast %60 : vector<4x8x64xf32> to vector<32x64xf32>
    %c7 = arith.constant 7 : index
    %c0_71 = arith.constant 0 : index
    %c0_72 = arith.constant 0 : index
    %62 = vector.load %arg4[%c7, %c0_71, %c0_72] : memref<9x64x64xf32, #tpu.memory_space<vmem>>, vector<1x64x64xf32>
    %63 = vector.shape_cast %62 : vector<1x64x64xf32> to vector<64x64xf32>
    %cst_73 = arith.constant dense<0.000000e+00> : vector<32x64xf32>
    %64 = tpu.matmul %61, %63, %cst_73 {dimension_numbers = #tpu.dot_dimension_numbers<[1], [0], [0], [1], [0, 0, 1, 1], [], []>} : vector<32x64xf32>, vector<64x64xf32>, vector<32x64xf32> -> vector<32x64xf32>
    %65 = arith.addf %59, %64 : vector<32x64xf32>
    %c2_74 = arith.constant 2 : index
    %c2_75 = arith.constant 2 : index
    %c0_76 = arith.constant 0 : index
    %66 = vector.load %arg9[%c2_74, %c2_75, %c0_76] : memref<6x10x64xf32, #tpu.memory_space<vmem>>, vector<4x8x64xf32>
    %67 = vector.shape_cast %66 : vector<4x8x64xf32> to vector<32x64xf32>
    %c8 = arith.constant 8 : index
    %c0_77 = arith.constant 0 : index
    %c0_78 = arith.constant 0 : index
    %68 = vector.load %arg4[%c8, %c0_77, %c0_78] : memref<9x64x64xf32, #tpu.memory_space<vmem>>, vector<1x64x64xf32>
    %69 = vector.shape_cast %68 : vector<1x64x64xf32> to vector<64x64xf32>
    %cst_79 = arith.constant dense<0.000000e+00> : vector<32x64xf32>
    %70 = tpu.matmul %67, %69, %cst_79 {dimension_numbers = #tpu.dot_dimension_numbers<[1], [0], [0], [1], [0, 0, 1, 1], [], []>} : vector<32x64xf32>, vector<64x64xf32>, vector<32x64xf32> -> vector<32x64xf32>
    %71 = arith.addf %65, %70 : vector<32x64xf32>
    %c0_80 = arith.constant 0 : index
    %c0_81 = arith.constant 0 : index
    %72 = vector.load %arg5[%c0_80, %c0_81] : memref<1x64xf32, #tpu.memory_space<vmem>>, vector<1x64xf32>
    %73 = vector.broadcast %72 : vector<1x64xf32> to vector<32x64xf32>
    %74 = arith.addf %71, %73 : vector<32x64xf32>
    %cst_82 = arith.constant 0.000000e+00 : f32
    %75 = vector.broadcast %cst_82 : f32 to vector<32x64xf32>
    %76 = arith.maximumf %74, %75 : vector<32x64xf32>
    %c0_83 = arith.constant 0 : index
    %c0_84 = arith.constant 0 : index
    %77 = vector.load %arg6[%c0_83, %c0_84] : memref<64x1024xf32, #tpu.memory_space<vmem>>, vector<64x1024xf32>
    %cst_85 = arith.constant dense<0.000000e+00> : vector<32x1024xf32>
    %78 = tpu.matmul %76, %77, %cst_85 {dimension_numbers = #tpu.dot_dimension_numbers<[1], [0], [0], [1], [0, 0, 1, 1], [], []>} : vector<32x64xf32>, vector<64x1024xf32>, vector<32x1024xf32> -> vector<32x1024xf32>
    %c0_86 = arith.constant 0 : index
    %c0_87 = arith.constant 0 : index
    %79 = vector.load %arg7[%c0_86, %c0_87] : memref<1x1024xf32, #tpu.memory_space<vmem>>, vector<1x1024xf32>
    %80 = vector.broadcast %79 : vector<1x1024xf32> to vector<32x1024xf32>
    %81 = arith.addf %78, %80 : vector<32x1024xf32>
    %c0_88 = arith.constant 0 : index
    %c0_89 = arith.constant 0 : index
    %c0_90 = arith.constant 0 : index
    %82 = vector.load %arg1[%c0_88, %c0_89, %c0_90] : memref<1x32x1024xf32, #tpu.memory_space<vmem>>, vector<1x32x1024xf32>
    %83 = vector.shape_cast %82 : vector<1x32x1024xf32> to vector<32x1024xf32>
    %84 = arith.addf %81, %83 : vector<32x1024xf32>
    %cst_91 = arith.constant 0.000000e+00 : f32
    %85 = vector.broadcast %cst_91 : f32 to vector<32x1024xf32>
    %86 = arith.maximumf %84, %85 : vector<32x1024xf32>
    %c0_92 = arith.constant 0 : index
    %c0_93 = arith.constant 0 : index
    %c0_94 = arith.constant 0 : index
    %87 = vector.load %arg8[%c0_92, %c0_93, %c0_94] : memref<1x32x1024xf32, #tpu.memory_space<vmem>>, vector<1x32x1024xf32>
    %88 = vector.shape_cast %87 : vector<1x32x1024xf32> to vector<32x1024xf32>
    %89 = vector.shape_cast %86 : vector<32x1024xf32> to vector<1x32x1024xf32>
    tpu.vector_store %arg8[%c0_92, %c0_93, %c0_94], %89 {strides = array<i32>} : memref<1x32x1024xf32, #tpu.memory_space<vmem>>, vector<1x32x1024xf32>,
    return
  }
  func.func @transform_0(%arg0: i32) -> (i32, i32, i32) {
    %c0_i32 = arith.constant 0 : i32
    %c0_i32_0 = arith.constant 0 : i32
    %c0_i32_1 = arith.constant 0 : i32
    return %arg0, %c0_i32, %c0_i32_0 : i32, i32, i32
  }
  func.func @transform_1(%arg0: i32) -> (i32, i32) {
    %c0_i32 = arith.constant 0 : i32
    %c0_i32_0 = arith.constant 0 : i32
    %c0_i32_1 = arith.constant 0 : i32
    return %c0_i32, %c0_i32_0 : i32, i32
  }
  func.func @transform_2(%arg0: i32) -> (i32, i32) {
    %c0_i32 = arith.constant 0 : i32
    %c0_i32_0 = arith.constant 0 : i32
    %c0_i32_1 = arith.constant 0 : i32
    return %c0_i32, %c0_i32_0 : i32, i32
  }
  func.func @transform_3(%arg0: i32) -> (i32, i32, i32) {
    %c0_i32 = arith.constant 0 : i32
    %c0_i32_0 = arith.constant 0 : i32
    %c0_i32_1 = arith.constant 0 : i32
    %c0_i32_2 = arith.constant 0 : i32
    return %c0_i32, %c0_i32_0, %c0_i32_1 : i32, i32, i32
  }
  func.func @transform_4(%arg0: i32) -> (i32, i32) {
    %c0_i32 = arith.constant 0 : i32
    %c0_i32_0 = arith.constant 0 : i32
    %c0_i32_1 = arith.constant 0 : i32
    return %c0_i32, %c0_i32_0 : i32, i32
  }
  func.func @transform_5(%arg0: i32) -> (i32, i32) {
    %c0_i32 = arith.constant 0 : i32
    %c0_i32_0 = arith.constant 0 : i32
    %c0_i32_1 = arith.constant 0 : i32
    return %c0_i32, %c0_i32_0 : i32, i32
  }
  func.func @transform_6(%arg0: i32) -> (i32, i32) {
    %c0_i32 = arith.constant 0 : i32
    %c0_i32_0 = arith.constant 0 : i32
    %c0_i32_1 = arith.constant 0 : i32
    return %c0_i32, %c0_i32_0 : i32, i32
  }
  func.func @transform_7(%arg0: i32) -> (i32, i32, i32) {
    %c0_i32 = arith.constant 0 : i32
    %c0_i32_0 = arith.constant 0 : i32
    %c0_i32_1 = arith.constant 0 : i32
    return %arg0, %c0_i32, %c0_i32_0 : i32, i32, i32
  }
}

</mosaic_0001>

<llo_original>
// kernel: tpu_custom_call.1
$region0: #{tpu_custom_call.1}
  #allocation0 [shape = 'u32[]', space=smem, size = 0x4, offset = 0x4, fixed_abs, tag = 'smem constant byte address 0x4 - core index']
  #allocation1 [shape = 'u32[72,128]{1,0:T(1,128)}', space=vmem, size = 0x9000, scoped, tag = 'internal scratch']
  #allocation2 [shape = 'f32[6,10,64]{2,1,0:T(8,128)}', space=vmem, size = 0xc000, scoped, tag = 'scratch operand']
  %s0 = inlined_call_operand.vmem [shape: f32[2,32,1024], index: 0, kind: input, shape index: {}]
  %s1 = inlined_call_operand.vmem [shape: f32[1024,64], index: 1, kind: input, shape index: {}]
  %s2 = inlined_call_operand.vmem [shape: f32[1,64], index: 2, kind: input, shape index: {}]
  %s3 = inlined_call_operand.vmem [shape: f32[9,64,64], index: 3, kind: input, shape index: {}]
  %s4 = inlined_call_operand.vmem [shape: f32[1,64], index: 4, kind: input, shape index: {}]
  %s5 = inlined_call_operand.hbm [shape: f32[64,1024], index: 5, kind: input, shape index: {}]
  %s6 = inlined_call_operand.vmem [shape: f32[1,1024], index: 6, kind: input, shape index: {}]
  %s7 = inlined_call_operand.hbm [shape: f32[2,32,1024], index: 7, kind: output, shape index: {}]
  %s8 = sld [smem:[#allocation0]]
  $region65: #{tpu_custom_call.1} parent=0
    _
  %s10 = ssub.s32 1, %s8
  %s11 = scalar_select 0, %s10, %s8
  $region1: #{tpu_custom_call.1} parent=0
    #allocation3 [shape = 'u8[262144]{0}', space=vmem, size = 0x40000, scoped, tag = 'input window, operand 5, single buffered']
    #allocation4 [shape = 's32[2]{0}', space=sflag, size = 0x8, scoped, tag = 'scoped memory for tpu_custom_call.1']
    #allocation5 [shape = 's32[2]{0}', space=sflag, size = 0x8, scoped, tag = 'scoped memory for tpu_custom_call.1']
    #allocation6 [shape = 'u8[262144]{0}', space=vmem, size = 0x40000, scoped, tag = 'output window, operand 0']
    %12 = vsyncpa [#allocation4], 0
    %13 = vsyncpa [#allocation5], 0
    %s14 = scalar_lea.sflag [#allocation5], 1
    %15 = vsyncpa %s14, 0
    loop: start=0, step=1, limit=4
    $region2: #{tpu_custom_call.1} parent=1 // loop_pre_header
      _
    $region3: #{tpu_custom_call.1} parent=1 // loop_header
      %s17 = sphi 0, %s21
      %p18 = scmp.ge.s32.totalorder %s17, 4
      %s27 = sphi 0, %s29
      %s30 = sphi 0, %s27
      %s31 = sphi 0, %s30
      %s47 = sphi 0, %s31
      %s51 = sphi 0, %s51
      %s53 = sphi 0, %s51
      %s54 = sphi 0, %s53
      %s68 = sphi 0, %s54
      %s72 = sphi 0, %s72
      %s74 = sphi 0, %s72
      %s75 = sphi 0, %s74
      %s89 = sphi 0, %s75
      %s93 = sphi 0, %s93
      %s95 = sphi 0, %s93
      %s96 = sphi 0, %s95
      %s110 = sphi 0, %s96
      %s114 = sphi 0, %s114
      %s116 = sphi 0, %s114
      %s117 = sphi 0, %s116
      %s131 = sphi 0, %s117
      %s135 = sphi 0, %s135
      %s137 = sphi 0, %s135
      %s138 = sphi 0, %s137
      %s152 = sphi 0, %s138
      %s156 = sphi 0, %s156
      %s158 = sphi 0, %s156
      %s159 = sphi 0, %s158
      %s173 = sphi 0, %s159
      %s179 = sphi 0, %s181
      %s182 = sphi 0, %s179
      %s183 = sphi 0, %s182
      %s199 = sphi 0, %s183
    $region4: #{tpu_custom_call.1} parent=1 // loop_header_branch
      %20 = sbr.rel (%p18) target = $region8
    $region5: #{tpu_custom_call.1} parent=1 // loop_body
      %s22 = ssub.s32 %s17, 1
      %s23 = ssub.s32 %s17, 2
      %s24 = sadd.s32 %s17, 1
      %s25 = ssub.s32 %s17, %s24
      %p26 = scmp.eq.s32.totalorder %s25, 0
      %s28 = sadd.s32 %s27, 1
      %s29 = scalar_select %p26, %s27, %s28
      %p32 = pneg %p26
      %p33 = scmp.eq.s32.totalorder %s17, 1
      %p34 = por %p32, %p33
      %p35 = scmp.ne.s32.totalorder %s27, %s30
      %p36 = scmp.eq.s32.totalorder %s17, 0
      %p37 = por %p35, %p36
      %p38 = scmp.ne.s32.totalorder %s27, %s30
      %p39 = scmp.eq.s32.totalorder %s22, 1
      %p40 = por %p38, %p39
      %p41 = scmp.ne.s32.totalorder %s30, %s31
      %p42 = scmp.eq.s32.totalorder %s22, 0
      %p43 = por %p41, %p42
      %p44 = scmp.ne.s32.totalorder %s30, %s31
      %p45 = scmp.eq.s32.totalorder %s23, 1
      %p46 = por %p44, %p45
      %p48 = scmp.ne.s32.totalorder %s31, %s47
      %p49 = scmp.eq.s32.totalorder %s23, 0
      %p50 = por %p48, %p49
      %s52 = sadd.s32 %s51, 1
      %p55 = scmp.eq.s32.totalorder %s17, 1
      %p56 = scmp.ne.s32.totalorder %s51, %s53
      %p57 = scmp.eq.s32.totalorder %s17, 0
      %p58 = por %p56, %p57
      %p59 = scmp.ne.s32.totalorder %s51, %s53
      %p60 = scmp.eq.s32.totalorder %s22, 1
      %p61 = por %p59, %p60
      %p62 = scmp.ne.s32.totalorder %s53, %s54
      %p63 = scmp.eq.s32.totalorder %s22, 0
      %p64 = por %p62, %p63
      %p65 = scmp.ne.s32.totalorder %s53, %s54
      %p66 = scmp.eq.s32.totalorder %s23, 1
      %p67 = por %p65, %p66
      %p69 = scmp.ne.s32.totalorder %s54, %s68
      %p70 = scmp.eq.s32.totalorder %s23, 0
      %p71 = por %p69, %p70
      %s73 = sadd.s32 %s72, 1
      %p76 = scmp.eq.s32.totalorder %s17, 1
      %p77 = scmp.ne.s32.totalorder %s72, %s74
      %p78 = scmp.eq.s32.totalorder %s17, 0
      %p79 = por %p77, %p78
      %p80 = scmp.ne.s32.totalorder %s72, %s74
      %p81 = scmp.eq.s32.totalorder %s22, 1
      %p82 = por %p80, %p81
      %p83 = scmp.ne.s32.totalorder %s74, %s75
      %p84 = scmp.eq.s32.totalorder %s22, 0
      %p85 = por %p83, %p84
      %p86 = scmp.ne.s32.totalorder %s74, %s75
      %p87 = scmp.eq.s32.totalorder %s23, 1
      %p88 = por %p86, %p87
      %p90 = scmp.ne.s32.totalorder %s75, %s89
      %p91 = scmp.eq.s32.totalorder %s23, 0
      %p92 = por %p90, %p91
      %s94 = sadd.s32 %s93, 1
      %p97 = scmp.eq.s32.totalorder %s17, 1
      %p98 = scmp.ne.s32.totalorder %s93, %s95
      %p99 = scmp.eq.s32.totalorder %s17, 0
      %p100 = por %p98, %p99
      %p101 = scmp.ne.s32.totalorder %s93, %s95
      %p102 = scmp.eq.s32.totalorder %s22, 1
      %p103 = por %p101, %p102
      %p104 = scmp.ne.s32.totalorder %s95, %s96
      %p105 = scmp.eq.s32.totalorder %s22, 0
      %p106 = por %p104, %p105
      %p107 = scmp.ne.s32.totalorder %s95, %s96
      %p108 = scmp.eq.s32.totalorder %s23, 1
      %p109 = por %p107, %p108
      %p111 = scmp.ne.s32.totalorder %s96, %s110
      %p112 = scmp.eq.s32.totalorder %s23, 0
      %p113 = por %p111, %p112
      %s115 = sadd.s32 %s114, 1
      %p118 = scmp.eq.s32.totalorder %s17, 1
      %p119 = scmp.ne.s32.totalorder %s114, %s116
      %p120 = scmp.eq.s32.totalorder %s17, 0
      %p121 = por %p119, %p120
      %p122 = scmp.ne.s32.totalorder %s114, %s116
      %p123 = scmp.eq.s32.totalorder %s22, 1
      %p124 = por %p122, %p123
      %p125 = scmp.ne.s32.totalorder %s116, %s117
      %p126 = scmp.eq.s32.totalorder %s22, 0
      %p127 = por %p125, %p126
      %p128 = scmp.ne.s32.totalorder %s116, %s117
      %p129 = scmp.eq.s32.totalorder %s23, 1
      %p130 = por %p128, %p129
      %p132 = scmp.ne.s32.totalorder %s117, %s131
      %p133 = scmp.eq.s32.totalorder %s23, 0
      %p134 = por %p132, %p133
      %s136 = sadd.s32 %s135, 1
      %p139 = scmp.eq.s32.totalorder %s17, 1
      %p140 = scmp.ne.s32.totalorder %s135, %s137
      %p141 = scmp.eq.s32.totalorder %s17, 0
      %p142 = por %p140, %p141
      %p143 = scmp.ne.s32.totalorder %s135, %s137
      %p144 = scmp.eq.s32.totalorder %s22, 1
      %p145 = por %p143, %p144
      %p146 = scmp.ne.s32.totalorder %s137, %s138
      %p147 = scmp.eq.s32.totalorder %s22, 0
      %p148 = por %p146, %p147
      %p149 = scmp.ne.s32.totalorder %s137, %s138
      %p150 = scmp.eq.s32.totalorder %s23, 1
      %p151 = por %p149, %p150
      %p153 = scmp.ne.s32.totalorder %s138, %s152
      %p154 = scmp.eq.s32.totalorder %s23, 0
      %p155 = por %p153, %p154
      %s157 = sadd.s32 %s156, 1
      %p160 = scmp.eq.s32.totalorder %s17, 1
      %p161 = scmp.ne.s32.totalorder %s156, %s158
      %p162 = scmp.eq.s32.totalorder %s17, 0
      %p163 = por %p161, %p162
      %p164 = scmp.ne.s32.totalorder %s156, %s158
      %p165 = scmp.eq.s32.totalorder %s22, 1
      %p166 = por %p164, %p165
      %p167 = scmp.ne.s32.totalorder %s158, %s159
      %p168 = scmp.eq.s32.totalorder %s22, 0
      %p169 = por %p167, %p168
      %p170 = scmp.ne.s32.totalorder %s158, %s159
      %p171 = scmp.eq.s32.totalorder %s23, 1
      %p172 = por %p170, %p171
      %p174 = scmp.ne.s32.totalorder %s159, %s173
      %p175 = scmp.eq.s32.totalorder %s23, 0
      %p176 = por %p174, %p175
      %s177 = ssub.s32 %s17, %s24
      %p178 = scmp.eq.s32.totalorder %s177, 0
      %s180 = sadd.s32 %s179, 1
      %s181 = scalar_select %p178, %s179, %s180
      %p184 = pneg %p178
      %p185 = scmp.eq.s32.totalorder %s17, 1
      %p186 = por %p184, %p185
      %p187 = scmp.ne.s32.totalorder %s179, %s182
      %p188 = scmp.eq.s32.totalorder %s17, 0
      %p189 = por %p187, %p188
      %p190 = scmp.ne.s32.totalorder %s179, %s182
      %p191 = scmp.eq.s32.totalorder %s22, 1
      %p192 = por %p190, %p191
      %p193 = scmp.ne.s32.totalorder %s182, %s183
      %p194 = scmp.eq.s32.totalorder %s22, 0
      %p195 = por %p193, %p194
      %p196 = scmp.ne.s32.totalorder %s182, %s183
      %p197 = scmp.eq.s32.totalorder %s23, 1
      %p198 = por %p196, %p197
      %p200 = scmp.ne.s32.totalorder %s183, %s199
      %p201 = scmp.eq.s32.totalorder %s23, 0
      %p202 = por %p200, %p201
      %p203 = scmp.le.s32.totalorder 1, %s17
      %p204 = scmp.lt.s32.totalorder %s17, 3
      %p205 = pnand %p203, %p204
      %p206 = pneg %p205
      // Predicated region
      $region9: #{tpu_custom_call.1} parent=5 // pred_check
        _
      $region10: #{tpu_custom_call.1} parent=5 // pred_check_branch
        %208 = sbr.rel (%p205) target = $region12
      $region11: #{tpu_custom_call.1} parent=5 // pred_region
        %s209 = ssub.s32 %s17, 1
        // Predicated region
        $region13: #{tpu_custom_call.1} parent=11 // pred_check
          %p210 = pneg %p64
        $region14: #{tpu_custom_call.1} parent=11 // pred_check_branch
          %212 = sbr.rel (%p210) target = $region16
        $region15: #{tpu_custom_call.1} parent=11 // pred_region
          _
        $region16: #{tpu_custom_call.1} parent=11 // pred_fallthru
          _
        // Predicated region
        $region17: #{tpu_custom_call.1} parent=11 // pred_check
          %p213 = pneg %p85
        $region18: #{tpu_custom_call.1} parent=11 // pred_check_branch
          %215 = sbr.rel (%p213) target = $region20
        $region19: #{tpu_custom_call.1} parent=11 // pred_region
          _
        $region20: #{tpu_custom_call.1} parent=11 // pred_fallthru
          _
        // Predicated region
        $region21: #{tpu_custom_call.1} parent=11 // pred_check
          %p216 = pneg %p106
        $region22: #{tpu_custom_call.1} parent=11 // pred_check_branch
          %218 = sbr.rel (%p216) target = $region24
        $region23: #{tpu_custom_call.1} parent=11 // pred_region
          _
        $region24: #{tpu_custom_call.1} parent=11 // pred_fallthru
          _
        // Predicated region
        $region25: #{tpu_custom_call.1} parent=11 // pred_check
          %p219 = pneg %p127
        $region26: #{tpu_custom_call.1} parent=11 // pred_check_branch
          %221 = sbr.rel (%p219) target = $region28
        $region27: #{tpu_custom_call.1} parent=11 // pred_region
          _
        $region28: #{tpu_custom_call.1} parent=11 // pred_fallthru
          _
        // Predicated region
        $region29: #{tpu_custom_call.1} parent=11 // pred_check
          %p222 = pneg %p148
        $region30: #{tpu_custom_call.1} parent=11 // pred_check_branch
          %224 = sbr.rel (%p222) target = $region32
        $region31: #{tpu_custom_call.1} parent=11 // pred_region
          %226 = vsyncadd [#allocation4], 0
          %s227 = sshll.u32 %s5, 4
          %s228 = int_to_ptr.hbm [resolvable:$true] %s227
          %s229 = sshll.u32 [#allocation3], 4
          %s230 = int_to_ptr.vmem [resolvable:$true] %s229
          %235 = dma.hbm_to_vmem [thread:$0]  %s228, 8192, %s230, [#allocation4], 1024, 1024, 64
        $region32: #{tpu_custom_call.1} parent=11 // pred_fallthru
          _
        // Predicated region
        $region33: #{tpu_custom_call.1} parent=11 // pred_check
          %p236 = pneg %p169
        $region34: #{tpu_custom_call.1} parent=11 // pred_check_branch
          %238 = sbr.rel (%p236) target = $region36
        $region35: #{tpu_custom_call.1} parent=11 // pred_region
          _
        $region36: #{tpu_custom_call.1} parent=11 // pred_fallthru
          _
      $region12: #{tpu_custom_call.1} parent=5 // pred_fallthru
        _
      %p239 = scmp.lt.s32.totalorder %s17, 2
      // Predicated region
      $region37: #{tpu_custom_call.1} parent=5 // pred_check
        %p240 = pneg %p239
      $region38: #{tpu_custom_call.1} parent=5 // pred_check_branch
        %242 = sbr.rel (%p240) target = $region40
      $region39: #{tpu_custom_call.1} parent=5 // pred_region
        // Predicated region
        $region41: #{tpu_custom_call.1} parent=39 // pred_check
          %p243 = pneg %p37
        $region42: #{tpu_custom_call.1} parent=39 // pred_check_branch
          %245 = sbr.rel (%p243) target = $region44
        $region43: #{tpu_custom_call.1} parent=39 // pred_region
          %p246 = scmp.lt.s32.totalorder %s17, 1
          %s247 = scalar_select %p246, %s17, 1
          %s248 = smul.addr %s247, 32
          %s249 = smul.addr %s248, 8
          %s250 = scalar_lea.vmem %s0, %s249
        $region44: #{tpu_custom_call.1} parent=39 // pred_fallthru
          _
      $region40: #{tpu_custom_call.1} parent=5 // pred_fallthru
        _
      %p251 = scmp.le.s32.totalorder 1, %s17
      %p252 = scmp.lt.s32.totalorder %s17, 3
      %p253 = pnand %p251, %p252
      %p254 = pneg %p253
      // Predicated region
      $region45: #{tpu_custom_call.1} parent=5 // pred_check
        _
      $region46: #{tpu_custom_call.1} parent=5 // pred_check_branch
        %256 = sbr.rel (%p253) target = $region48
      $region47: #{tpu_custom_call.1} parent=5 // pred_region
        %s257 = ssub.s32 %s17, 1
        // Predicated region
        $region49: #{tpu_custom_call.1} parent=47 // pred_check
          %p258 = pneg %p148
        $region50: #{tpu_custom_call.1} parent=47 // pred_check_branch
          %260 = sbr.rel (%p258) target = $region52
        $region51: #{tpu_custom_call.1} parent=47 // pred_region
          %262 = dma.done [#allocation4], 8192
        $region52: #{tpu_custom_call.1} parent=47 // pred_fallthru
          _
        %p263 = scmp.lt.s32.totalorder %s22, 1
        %s264 = scalar_select %p263, %s22, 1
        %s265 = smul.addr %s264, 32
        %s266 = smul.addr %s265, 8
        %s267 = scalar_lea.vmem %s0, %s266
        %p268 = pneg %p43
        %p269 = pneg %p40
        %p270 = pneg %p64
        %p271 = pneg %p61
        %p272 = pneg %p85
        %p273 = pneg %p82
        %p274 = pneg %p106
        %p275 = pneg %p103
        %p276 = pneg %p127
        %p277 = pneg %p124
        %p278 = pneg %p148
        %p279 = pneg %p145
        %p280 = pneg %p169
        %p281 = pneg %p166
        %p282 = pneg %p195
        %p283 = pneg %p192
        %s284 = sand.u32 %s182, 1
        %s285 = scalar_lea.sflag [#allocation5], %s284
        %s286 = sand.u32 %s182, 1
        %s287 = smul.addr %s286, 256
        %s288 = scalar_lea.vmem [#allocation6], %s287
        %p289 = scmp.lt.s32.totalorder %s22, 1
        %s290 = scalar_select %p289, %s22, 1
        %s291 = smul.addr %s290, 32
        %s292 = smul.addr %s291, 8
        %s293 = scalar_lea.vmem %s0, %s292
        %v294 = vld [vmem:[%s293] sm:$0xff]
        %v295 = vld [vmem:[%s293 + $0x8] sm:$0xff]
        %v296 = vld [vmem:[%s293 + $0x10] sm:$0xff]
        %v297 = vld [vmem:[%s293 + $0x18] sm:$0xff]
        %v298 = vld [vmem:[%s293 + $0x20] sm:$0xff]
        %v299 = vld [vmem:[%s293 + $0x28] sm:$0xff]
        %v300 = vld [vmem:[%s293 + $0x30] sm:$0xff]
        %v301 = vld [vmem:[%s293 + $0x38] sm:$0xff]
        %v302 = vld [vmem:[%s293 + $0x40] sm:$0xff]
        %v303 = vld [vmem:[%s293 + $0x48] sm:$0xff]
        %v304 = vld [vmem:[%s293 + $0x50] sm:$0xff]
        %v305 = vld [vmem:[%s293 + $0x58] sm:$0xff]
        %v306 = vld [vmem:[%s293 + $0x60] sm:$0xff]
        %v307 = vld [vmem:[%s293 + $0x68] sm:$0xff]
        %v308 = vld [vmem:[%s293 + $0x70] sm:$0xff]
        %v309 = vld [vmem:[%s293 + $0x78] sm:$0xff]
        %v310 = vld [vmem:[%s293 + $0x80] sm:$0xff]
        %v311 = vld [vmem:[%s293 + $0x88] sm:$0xff]
        %v312 = vld [vmem:[%s293 + $0x90] sm:$0xff]
        %v313 = vld [vmem:[%s293 + $0x98] sm:$0xff]
        %v314 = vld [vmem:[%s293 + $0xa0] sm:$0xff]
        %v315 = vld [vmem:[%s293 + $0xa8] sm:$0xff]
        %v316 = vld [vmem:[%s293 + $0xb0] sm:$0xff]
        %v317 = vld [vmem:[%s293 + $0xb8] sm:$0xff]
        %v318 = vld [vmem:[%s293 + $0xc0] sm:$0xff]
        %v319 = vld [vmem:[%s293 + $0xc8] sm:$0xff]
        %v320 = vld [vmem:[%s293 + $0xd0] sm:$0xff]
        %v321 = vld [vmem:[%s293 + $0xd8] sm:$0xff]
        %v322 = vld [vmem:[%s293 + $0xe0] sm:$0xff]
        %v323 = vld [vmem:[%s293 + $0xe8] sm:$0xff]
        %v324 = vld [vmem:[%s293 + $0xf0] sm:$0xff]
        %v325 = vld [vmem:[%s293 + $0xf8] sm:$0xff]
        %v326 = vld [vmem:[%s1] sm:$0xff]
        %v327 = vld [vmem:[%s1 + $0x8] sm:$0xff]
        %v328 = vld [vmem:[%s1 + $0x10] sm:$0xff]
        %v329 = vld [vmem:[%s1 + $0x18] sm:$0xff]
        %v330 = vld [vmem:[%s1 + $0x20] sm:$0xff]
        %v331 = vld [vmem:[%s1 + $0x28] sm:$0xff]
        %v332 = vld [vmem:[%s1 + $0x30] sm:$0xff]
        %v333 = vld [vmem:[%s1 + $0x38] sm:$0xff]
        %v334 = vld [vmem:[%s1 + $0x40] sm:$0xff]
        %v335 = vld [vmem:[%s1 + $0x48] sm:$0xff]
        %v336 = vld [vmem:[%s1 + $0x50] sm:$0xff]
        %v337 = vld [vmem:[%s1 + $0x58] sm:$0xff]
        %v338 = vld [vmem:[%s1 + $0x60] sm:$0xff]
        %v339 = vld [vmem:[%s1 + $0x68] sm:$0xff]
        %v340 = vld [vmem:[%s1 + $0x70] sm:$0xff]
        %v341 = vld [vmem:[%s1 + $0x78] sm:$0xff]
        %v342 = vld [vmem:[%s1 + $0x80] sm:$0xff]
        %v343 = vld [vmem:[%s1 + $0x88] sm:$0xff]
        %v344 = vld [vmem:[%s1 + $0x90] sm:$0xff]
        %v345 = vld [vmem:[%s1 + $0x98] sm:$0xff]
        %v346 = vld [vmem:[%s1 + $0xa0] sm:$0xff]
        %v347 = vld [vmem:[%s1 + $0xa8] sm:$0xff]
        %v348 = vld [vmem:[%s1 + $0xb0] sm:$0xff]
        %v349 = vld [vmem:[%s1 + $0xb8] sm:$0xff]
        %v350 = vld [vmem:[%s1 + $0xc0] sm:$0xff]
        %v351 = vld [vmem:[%s1 + $0xc8] sm:$0xff]
        %v352 = vld [vmem:[%s1 + $0xd0] sm:$0xff]
        %v353 = vld [vmem:[%s1 + $0xd8] sm:$0xff]
        %v354 = vld [vmem:[%s1 + $0xe0] sm:$0xff]
        %v355 = vld [vmem:[%s1 + $0xe8] sm:$0xff]
        %v356 = vld [vmem:[%s1 + $0xf0] sm:$0xff]
        %v357 = vld [vmem:[%s1 + $0xf8] sm:$0xff]
        %v358 = vld [vmem:[%s1 + $0x100] sm:$0xff]
        %v359 = vld [vmem:[%s1 + $0x108] sm:$0xff]
        %v360 = vld [vmem:[%s1 + $0x110] sm:$0xff]
        %v361 = vld [vmem:[%s1 + $0x118] sm:$0xff]
        %v362 = vld [vmem:[%s1 + $0x120] sm:$0xff]
        %v363 = vld [vmem:[%s1 + $0x128] sm:$0xff]
        %v364 = vld [vmem:[%s1 + $0x130] sm:$0xff]
        %v365 = vld [vmem:[%s1 + $0x138] sm:$0xff]
        %v366 = vld [vmem:[%s1 + $0x140] sm:$0xff]
        %v367 = vld [vmem:[%s1 + $0x148] sm:$0xff]
        %v368 = vld [vmem:[%s1 + $0x150] sm:$0xff]
        %v369 = vld [vmem:[%s1 + $0x158] sm:$0xff]
        %v370 = vld [vmem:[%s1 + $0x160] sm:$0xff]
        %v371 = vld [vmem:[%s1 + $0x168] sm:$0xff]
        %v372 = vld [vmem:[%s1 + $0x170] sm:$0xff]
        %v373 = vld [vmem:[%s1 + $0x178] sm:$0xff]
        %v374 = vld [vmem:[%s1 + $0x180] sm:$0xff]
        %v375 = vld [vmem:[%s1 + $0x188] sm:$0xff]
        %v376 = vld [vmem:[%s1 + $0x190] sm:$0xff]
        %v377 = vld [vmem:[%s1 + $0x198] sm:$0xff]
        %v378 = vld [vmem:[%s1 + $0x1a0] sm:$0xff]
        %v379 = vld [vmem:[%s1 + $0x1a8] sm:$0xff]
        %v380 = vld [vmem:[%s1 + $0x1b0] sm:$0xff]
        %v381 = vld [vmem:[%s1 + $0x1b8] sm:$0xff]
        %v382 = vld [vmem:[%s1 + $0x1c0] sm:$0xff]
        %v383 = vld [vmem:[%s1 + $0x1c8] sm:$0xff]
        %v384 = vld [vmem:[%s1 + $0x1d0] sm:$0xff]
        %v385 = vld [vmem:[%s1 + $0x1d8] sm:$0xff]
        %v386 = vld [vmem:[%s1 + $0x1e0] sm:$0xff]
        %v387 = vld [vmem:[%s1 + $0x1e8] sm:$0xff]
        %v388 = vld [vmem:[%s1 + $0x1f0] sm:$0xff]
        %v389 = vld [vmem:[%s1 + $0x1f8] sm:$0xff]
        %v390 = vld [vmem:[%s1 + $0x200] sm:$0xff]
        %v391 = vld [vmem:[%s1 + $0x208] sm:$0xff]
        %v392 = vld [vmem:[%s1 + $0x210] sm:$0xff]
        %v393 = vld [vmem:[%s1 + $0x218] sm:$0xff]
        %v394 = vld [vmem:[%s1 + $0x220] sm:$0xff]
        %v395 = vld [vmem:[%s1 + $0x228] sm:$0xff]
        %v396 = vld [vmem:[%s1 + $0x230] sm:$0xff]
        %v397 = vld [vmem:[%s1 + $0x238] sm:$0xff]
        %v398 = vld [vmem:[%s1 + $0x240] sm:$0xff]
        %v399 = vld [vmem:[%s1 + $0x248] sm:$0xff]
        %v400 = vld [vmem:[%s1 + $0x250] sm:$0xff]
        %v401 = vld [vmem:[%s1 + $0x258] sm:$0xff]
        %v402 = vld [vmem:[%s1 + $0x260] sm:$0xff]
        %v403 = vld [vmem:[%s1 + $0x268] sm:$0xff]
        %v404 = vld [vmem:[%s1 + $0x270] sm:$0xff]
        %v405 = vld [vmem:[%s1 + $0x278] sm:$0xff]
        %v406 = vld [vmem:[%s1 + $0x280] sm:$0xff]
        %v407 = vld [vmem:[%s1 + $0x288] sm:$0xff]
        %v408 = vld [vmem:[%s1 + $0x290] sm:$0xff]
        %v409 = vld [vmem:[%s1 + $0x298] sm:$0xff]
        %v410 = vld [vmem:[%s1 + $0x2a0] sm:$0xff]
        %v411 = vld [vmem:[%s1 + $0x2a8] sm:$0xff]
        %v412 = vld [vmem:[%s1 + $0x2b0] sm:$0xff]
        %v413 = vld [vmem:[%s1 + $0x2b8] sm:$0xff]
        %v414 = vld [vmem:[%s1 + $0x2c0] sm:$0xff]
        %v415 = vld [vmem:[%s1 + $0x2c8] sm:$0xff]
        %v416 = vld [vmem:[%s1 + $0x2d0] sm:$0xff]
        %v417 = vld [vmem:[%s1 + $0x2d8] sm:$0xff]
        %v418 = vld [vmem:[%s1 + $0x2e0] sm:$0xff]
        %v419 = vld [vmem:[%s1 + $0x2e8] sm:$0xff]
        %v420 = vld [vmem:[%s1 + $0x2f0] sm:$0xff]
        %v421 = vld [vmem:[%s1 + $0x2f8] sm:$0xff]
        %v422 = vld [vmem:[%s1 + $0x300] sm:$0xff]
        %v423 = vld [vmem:[%s1 + $0x308] sm:$0xff]
        %v424 = vld [vmem:[%s1 + $0x310] sm:$0xff]
        %v425 = vld [vmem:[%s1 + $0x318] sm:$0xff]
        %v426 = vld [vmem:[%s1 + $0x320] sm:$0xff]
        %v427 = vld [vmem:[%s1 + $0x328] sm:$0xff]
        %v428 = vld [vmem:[%s1 + $0x330] sm:$0xff]
        %v429 = vld [vmem:[%s1 + $0x338] sm:$0xff]
        %v430 = vld [vmem:[%s1 + $0x340] sm:$0xff]
        %v431 = vld [vmem:[%s1 + $0x348] sm:$0xff]
        %v432 = vld [vmem:[%s1 + $0x350] sm:$0xff]
        %v433 = vld [vmem:[%s1 + $0x358] sm:$0xff]
        %v434 = vld [vmem:[%s1 + $0x360] sm:$0xff]
        %v435 = vld [vmem:[%s1 + $0x368] sm:$0xff]
        %v436 = vld [vmem:[%s1 + $0x370] sm:$0xff]
        %v437 = vld [vmem:[%s1 + $0x378] sm:$0xff]
        %v438 = vld [vmem:[%s1 + $0x380] sm:$0xff]
        %v439 = vld [vmem:[%s1 + $0x388] sm:$0xff]
        %v440 = vld [vmem:[%s1 + $0x390] sm:$0xff]
        %v441 = vld [vmem:[%s1 + $0x398] sm:$0xff]
        %v442 = vld [vmem:[%s1 + $0x3a0] sm:$0xff]
        %v443 = vld [vmem:[%s1 + $0x3a8] sm:$0xff]
        %v444 = vld [vmem:[%s1 + $0x3b0] sm:$0xff]
        %v445 = vld [vmem:[%s1 + $0x3b8] sm:$0xff]
        %v446 = vld [vmem:[%s1 + $0x3c0] sm:$0xff]
        %v447 = vld [vmem:[%s1 + $0x3c8] sm:$0xff]
        %v448 = vld [vmem:[%s1 + $0x3d0] sm:$0xff]
        %v449 = vld [vmem:[%s1 + $0x3d8] sm:$0xff]
        %v450 = vld [vmem:[%s1 + $0x3e0] sm:$0xff]
        %v451 = vld [vmem:[%s1 + $0x3e8] sm:$0xff]
        %v452 = vld [vmem:[%s1 + $0x3f0] sm:$0xff]
        %v453 = vld [vmem:[%s1 + $0x3f8] sm:$0xff]
        %v454 = vld [vmem:[%s2] sm:$0x1]
        %v456 = vperm.slane %v454, 0
        %458 = vmatpush.msra.mxu0 %v341
        %459 = vmatpush.msra.mxu0 %v340
        %460 = vmatpush.msra.mxu0 %v339
        %461 = vmatpush.msra.mxu0 %v338
        %462 = vmatpush.msra.mxu0 %v337
        %463 = vmatpush.msra.mxu0 %v336
        %464 = vmatpush.msra.mxu0 %v335
        %465 = vmatpush.msra.mxu0 %v334
        %466 = vmatpush.msra.mxu0 %v333
        %467 = vmatpush.msra.mxu0 %v332
        %468 = vmatpush.msra.mxu0 %v331
        %469 = vmatpush.msra.mxu0 %v330
        %470 = vmatpush.msra.mxu0 %v329
        %471 = vmatpush.msra.mxu0 %v328
        %472 = vmatpush.msra.mxu0 %v327
        %473 = vmatpush.msra.mxu0 %v326
        %474 = vmatmul.f32.gmra.mxu0 %v294
        %v475 = vpop.f32.mrf.mxu0
        %v476 = vadd.f32 %v456, %v475
        %477 = vmatmul.f32.gmra.mxu0 %v302
        %v478 = vpop.f32.mrf.mxu0
        %v479 = vadd.f32 %v456, %v478
        %480 = vmatmul.f32.gmra.mxu0 %v310
        %v481 = vpop.f32.mrf.mxu0
        %v482 = vadd.f32 %v456, %v481
        %483 = vmatmul.f32.gmra.mxu0 %v318
        %v484 = vpop.f32.mrf.mxu0
        %v485 = vadd.f32 %v456, %v484
        %486 = vdwg.mxu0
        %487 = vmatpush.msra.mxu0 %v357
        %488 = vmatpush.msra.mxu0 %v356
        %489 = vmatpush.msra.mxu0 %v355
        %490 = vmatpush.msra.mxu0 %v354
        %491 = vmatpush.msra.mxu0 %v353
        %492 = vmatpush.msra.mxu0 %v352
        %493 = vmatpush.msra.mxu0 %v351
        %494 = vmatpush.msra.mxu0 %v350
        %495 = vmatpush.msra.mxu0 %v349
        %496 = vmatpush.msra.mxu0 %v348
        %497 = vmatpush.msra.mxu0 %v347
        %498 = vmatpush.msra.mxu0 %v346
        %499 = vmatpush.msra.mxu0 %v345
        %500 = vmatpush.msra.mxu0 %v344
        %501 = vmatpush.msra.mxu0 %v343
        %502 = vmatpush.msra.mxu0 %v342
        %503 = vmatmul.f32.gmra.mxu0 %v295
        %v504 = vpop.f32.mrf.mxu0
        %v505 = vadd.f32 %v476, %v504
        %506 = vmatmul.f32.gmra.mxu0 %v303
        %v507 = vpop.f32.mrf.mxu0
        %v508 = vadd.f32 %v479, %v507
        %509 = vmatmul.f32.gmra.mxu0 %v311
        %v510 = vpop.f32.mrf.mxu0
        %v511 = vadd.f32 %v482, %v510
        %512 = vmatmul.f32.gmra.mxu0 %v319
        %v513 = vpop.f32.mrf.mxu0
        %v514 = vadd.f32 %v485, %v513
        %515 = vdwg.mxu0
        %516 = vmatpush.msra.mxu0 %v373
        %517 = vmatpush.msra.mxu0 %v372
        %518 = vmatpush.msra.mxu0 %v371
        %519 = vmatpush.msra.mxu0 %v370
        %520 = vmatpush.msra.mxu0 %v369
        %521 = vmatpush.msra.mxu0 %v368
        %522 = vmatpush.msra.mxu0 %v367
        %523 = vmatpush.msra.mxu0 %v366
        %524 = vmatpush.msra.mxu0 %v365
        %525 = vmatpush.msra.mxu0 %v364
        %526 = vmatpush.msra.mxu0 %v363
        %527 = vmatpush.msra.mxu0 %v362
        %528 = vmatpush.msra.mxu0 %v361
        %529 = vmatpush.msra.mxu0 %v360
        %530 = vmatpush.msra.mxu0 %v359
        %531 = vmatpush.msra.mxu0 %v358
        %532 = vmatmul.f32.gmra.mxu0 %v296
        %v533 = vpop.f32.mrf.mxu0
        %v534 = vadd.f32 %v505, %v533
        %535 = vmatmul.f32.gmra.mxu0 %v304
        %v536 = vpop.f32.mrf.mxu0
        %v537 = vadd.f32 %v508, %v536
        %538 = vmatmul.f32.gmra.mxu0 %v312
        %v539 = vpop.f32.mrf.mxu0
        %v540 = vadd.f32 %v511, %v539
        %541 = vmatmul.f32.gmra.mxu0 %v320
        %v542 = vpop.f32.mrf.mxu0
        %v543 = vadd.f32 %v514, %v542
        %544 = vdwg.mxu0
        %545 = vmatpush.msra.mxu0 %v389
        %546 = vmatpush.msra.mxu0 %v388
        %547 = vmatpush.msra.mxu0 %v387
        %548 = vmatpush.msra.mxu0 %v386
        %549 = vmatpush.msra.mxu0 %v385
        %550 = vmatpush.msra.mxu0 %v384
        %551 = vmatpush.msra.mxu0 %v383
        %552 = vmatpush.msra.mxu0 %v382
        %553 = vmatpush.msra.mxu0 %v381
        %554 = vmatpush.msra.mxu0 %v380
        %555 = vmatpush.msra.mxu0 %v379
        %556 = vmatpush.msra.mxu0 %v378
        %557 = vmatpush.msra.mxu0 %v377
        %558 = vmatpush.msra.mxu0 %v376
        %559 = vmatpush.msra.mxu0 %v375
        %560 = vmatpush.msra.mxu0 %v374
        %561 = vmatmul.f32.gmra.mxu0 %v297
        %v562 = vpop.f32.mrf.mxu0
        %v563 = vadd.f32 %v534, %v562
        %564 = vmatmul.f32.gmra.mxu0 %v305
        %v565 = vpop.f32.mrf.mxu0
        %v566 = vadd.f32 %v537, %v565
        %567 = vmatmul.f32.gmra.mxu0 %v313
        %v568 = vpop.f32.mrf.mxu0
        %v569 = vadd.f32 %v540, %v568
        %570 = vmatmul.f32.gmra.mxu0 %v321
        %v571 = vpop.f32.mrf.mxu0
        %v572 = vadd.f32 %v543, %v571
        %573 = vdwg.mxu0
        %574 = vmatpush.msra.mxu0 %v405
        %575 = vmatpush.msra.mxu0 %v404
        %576 = vmatpush.msra.mxu0 %v403
        %577 = vmatpush.msra.mxu0 %v402
        %578 = vmatpush.msra.mxu0 %v401
        %579 = vmatpush.msra.mxu0 %v400
        %580 = vmatpush.msra.mxu0 %v399
        %581 = vmatpush.msra.mxu0 %v398
        %582 = vmatpush.msra.mxu0 %v397
        %583 = vmatpush.msra.mxu0 %v396
        %584 = vmatpush.msra.mxu0 %v395
        %585 = vmatpush.msra.mxu0 %v394
        %586 = vmatpush.msra.mxu0 %v393
        %587 = vmatpush.msra.mxu0 %v392
        %588 = vmatpush.msra.mxu0 %v391
        %589 = vmatpush.msra.mxu0 %v390
        %590 = vmatmul.f32.gmra.mxu0 %v298
        %v591 = vpop.f32.mrf.mxu0
        %v592 = vadd.f32 %v563, %v591
        %593 = vmatmul.f32.gmra.mxu0 %v306
        %v594 = vpop.f32.mrf.mxu0
        %v595 = vadd.f32 %v566, %v594
        %596 = vmatmul.f32.gmra.mxu0 %v314
        %v597 = vpop.f32.mrf.mxu0
        %v598 = vadd.f32 %v569, %v597
        %599 = vmatmul.f32.gmra.mxu0 %v322
        %v600 = vpop.f32.mrf.mxu0
        %v601 = vadd.f32 %v572, %v600
        %602 = vdwg.mxu0
        %603 = vmatpush.msra.mxu0 %v421
        %604 = vmatpush.msra.mxu0 %v420
        %605 = vmatpush.msra.mxu0 %v419
        %606 = vmatpush.msra.mxu0 %v418
        %607 = vmatpush.msra.mxu0 %v417
        %608 = vmatpush.msra.mxu0 %v416
        %609 = vmatpush.msra.mxu0 %v415
        %610 = vmatpush.msra.mxu0 %v414
        %611 = vmatpush.msra.mxu0 %v413
        %612 = vmatpush.msra.mxu0 %v412
        %613 = vmatpush.msra.mxu0 %v411
        %614 = vmatpush.msra.mxu0 %v410
        %615 = vmatpush.msra.mxu0 %v409
        %616 = vmatpush.msra.mxu0 %v408
        %617 = vmatpush.msra.mxu0 %v407
        %618 = vmatpush.msra.mxu0 %v406
        %619 = vmatmul.f32.gmra.mxu0 %v299
        %v620 = vpop.f32.mrf.mxu0
        %v621 = vadd.f32 %v592, %v620
        %622 = vmatmul.f32.gmra.mxu0 %v307
        %v623 = vpop.f32.mrf.mxu0
        %v624 = vadd.f32 %v595, %v623
        %625 = vmatmul.f32.gmra.mxu0 %v315
        %v626 = vpop.f32.mrf.mxu0
        %v627 = vadd.f32 %v598, %v626
        %628 = vmatmul.f32.gmra.mxu0 %v323
        %v629 = vpop.f32.mrf.mxu0
        %v630 = vadd.f32 %v601, %v629
        %631 = vdwg.mxu0
        %632 = vmatpush.msra.mxu0 %v437
        %633 = vmatpush.msra.mxu0 %v436
        %634 = vmatpush.msra.mxu0 %v435
        %635 = vmatpush.msra.mxu0 %v434
        %636 = vmatpush.msra.mxu0 %v433
        %637 = vmatpush.msra.mxu0 %v432
        %638 = vmatpush.msra.mxu0 %v431
        %639 = vmatpush.msra.mxu0 %v430
        %640 = vmatpush.msra.mxu0 %v429
        %641 = vmatpush.msra.mxu0 %v428
        %642 = vmatpush.msra.mxu0 %v427
        %643 = vmatpush.msra.mxu0 %v426
        %644 = vmatpush.msra.mxu0 %v425
        %645 = vmatpush.msra.mxu0 %v424
        %646 = vmatpush.msra.mxu0 %v423
        %647 = vmatpush.msra.mxu0 %v422
        %648 = vmatmul.f32.gmra.mxu0 %v300
        %v649 = vpop.f32.mrf.mxu0
        %v650 = vadd.f32 %v621, %v649
        %651 = vmatmul.f32.gmra.mxu0 %v308
        %v652 = vpop.f32.mrf.mxu0
        %v653 = vadd.f32 %v624, %v652
        %654 = vmatmul.f32.gmra.mxu0 %v316
        %v655 = vpop.f32.mrf.mxu0
        %v656 = vadd.f32 %v627, %v655
        %657 = vmatmul.f32.gmra.mxu0 %v324
        %v658 = vpop.f32.mrf.mxu0
        %v659 = vadd.f32 %v630, %v658
        %660 = vdwg.mxu0
        %661 = vmatpush.msra.mxu0 %v453
        %662 = vmatpush.msra.mxu0 %v452
        %663 = vmatpush.msra.mxu0 %v451
        %664 = vmatpush.msra.mxu0 %v450
        %665 = vmatpush.msra.mxu0 %v449
        %666 = vmatpush.msra.mxu0 %v448
        %667 = vmatpush.msra.mxu0 %v447
        %668 = vmatpush.msra.mxu0 %v446
        %669 = vmatpush.msra.mxu0 %v445
        %670 = vmatpush.msra.mxu0 %v444
        %671 = vmatpush.msra.mxu0 %v443
        %672 = vmatpush.msra.mxu0 %v442
        %673 = vmatpush.msra.mxu0 %v441
        %674 = vmatpush.msra.mxu0 %v440
        %675 = vmatpush.msra.mxu0 %v439
        %676 = vmatpush.msra.mxu0 %v438
        %677 = vmatmul.f32.gmra.mxu0 %v301
        %v678 = vpop.f32.mrf.mxu0
        %v679 = vadd.f32 %v650, %v678
        %680 = vmatmul.f32.gmra.mxu0 %v309
        %v681 = vpop.f32.mrf.mxu0
        %v682 = vadd.f32 %v653, %v681
        %683 = vmatmul.f32.gmra.mxu0 %v317
        %v684 = vpop.f32.mrf.mxu0
        %v685 = vadd.f32 %v656, %v684
        %686 = vmatmul.f32.gmra.mxu0 %v325
        %v687 = vpop.f32.mrf.mxu0
        %v688 = vadd.f32 %v659, %v687
        %689 = vdwg.mxu0
        %v690 = vmax.f32 %v679, 0.0
        %v691 = vmax.f32 %v682, 0.0
        %v692 = vmax.f32 %v685, 0.0
        %v693 = vmax.f32 %v688, 0.0
        %vm694 = vcmask 523264
        %695 = vst.msk [vmem:[#allocation2] sm:$0xff] %vm694, 0.0
        %vm696 = vcmask 517120
        %697 = vst.msk [vmem:[#allocation2 + $0x8] sm:$0x3] %vm696, 0.0
        %s698 = scalar_lea.vmem [#allocation2], 80
        %699 = vst.msk [vmem:[%s698] sm:$0xff] %vm694, 0.0
        %700 = vst.msk [vmem:[%s698 + $0x8] sm:$0x3] %vm696, 0.0
        %s701 = scalar_lea.vmem [#allocation2], 16
        %vm702 = vcmask 516096
        %703 = vst.msk [vmem:[%s701] sm:$0x1] %vm702, 0.0
        %704 = vst.msk [vmem:[%s701 + $0x10] sm:$0x1] %vm702, 0.0
        %705 = vst.msk [vmem:[%s701 + $0x20] sm:$0x1] %vm702, 0.0
        %706 = vst.msk [vmem:[%s701 + $0x30] sm:$0x1] %vm702, 0.0
        %707 = vst.msk [vmem:[%s701 + $0x9] sm:$0x1] %vm702, 0.0
        %708 = vst.msk [vmem:[%s701 + $0x19] sm:$0x1] %vm702, 0.0
        %709 = vst.msk [vmem:[%s701 + $0x29] sm:$0x1] %vm702, 0.0
        %710 = vst.msk [vmem:[%s701 + $0x39] sm:$0x1] %vm702, 0.0
        %711 = vst.msk [vmem:[%s701 + $0x1] sm:$0xff] %vm694, %v690
        %712 = vst.msk [vmem:[%s701 + $0x11] sm:$0xff] %vm694, %v691
        %713 = vst.msk [vmem:[%s701 + $0x21] sm:$0xff] %vm694, %v692
        %714 = vst.msk [vmem:[%s701 + $0x31] sm:$0xff] %vm694, %v693
        %v715 = vld [vmem:[#allocation2] sm:$0xff]
        %v716 = vld [vmem:[#allocation2 + $0x10] sm:$0xff]
        %v717 = vld [vmem:[#allocation2 + $0x20] sm:$0xff]
        %v718 = vld [vmem:[#allocation2 + $0x30] sm:$0xff]
        %v719 = vld [vmem:[%s3] sm:$0xff]
        %v720 = vld [vmem:[%s3 + $0x8] sm:$0xff]
        %v721 = vld [vmem:[%s3 + $0x10] sm:$0xff]
        %v722 = vld [vmem:[%s3 + $0x18] sm:$0xff]
        %v723 = vld [vmem:[%s3 + $0x20] sm:$0xff]
        %v724 = vld [vmem:[%s3 + $0x28] sm:$0xff]
        %v725 = vld [vmem:[%s3 + $0x30] sm:$0xff]
        %v726 = vld [vmem:[%s3 + $0x38] sm:$0xff]
        %v727 = vld [vmem:[#allocation2 + $0x1] sm:$0xff]
        %v728 = vld [vmem:[#allocation2 + $0x11] sm:$0xff]
        %v729 = vld [vmem:[#allocation2 + $0x21] sm:$0xff]
        %v730 = vld [vmem:[#allocation2 + $0x31] sm:$0xff]
        %s731 = scalar_lea.vmem %s3, 64
        %v732 = vld [vmem:[%s731] sm:$0xff]
        %v733 = vld [vmem:[%s731 + $0x8] sm:$0xff]
        %v734 = vld [vmem:[%s731 + $0x10] sm:$0xff]
        %v735 = vld [vmem:[%s731 + $0x18] sm:$0xff]
        %v736 = vld [vmem:[%s731 + $0x20] sm:$0xff]
        %v737 = vld [vmem:[%s731 + $0x28] sm:$0xff]
        %v738 = vld [vmem:[%s731 + $0x30] sm:$0xff]
        %v739 = vld [vmem:[%s731 + $0x38] sm:$0xff]
        %v741 = vsel %vm694, %v727, 0
        %v744 = vsel %vm694, %v728, 0
        %v747 = vsel %vm694, %v729, 0
        %v750 = vsel %vm694, %v730, 0
        %752 = vmatpush.msra.mxu0 0.0
        %753 = vmatpush.msra.mxu0 0.0
        %754 = vmatpush.msra.mxu0 0.0
        %755 = vmatpush.msra.mxu0 0.0
        %756 = vmatpush.msra.mxu0 0.0
        %757 = vmatpush.msra.mxu0 0.0
        %758 = vmatpush.msra.mxu0 0.0
        %759 = vmatpush.msra.mxu0 0.0
        %760 = vmatpush.msra.mxu0 %v739
        %761 = vmatpush.msra.mxu0 %v738
        %762 = vmatpush.msra.mxu0 %v737
        %763 = vmatpush.msra.mxu0 %v736
        %764 = vmatpush.msra.mxu0 %v735
        %765 = vmatpush.msra.mxu0 %v734
        %766 = vmatpush.msra.mxu0 %v733
        %767 = vmatpush.msra.mxu0 %v732
        %768 = vmatmul.f32.gmra.mxu0 %v741
        %v769 = vpop.f32.mrf.mxu0
        %v770 = vadd.f32 0.0, %v769
        %771 = vmatmul.f32.gmra.mxu0 %v744
        %v772 = vpop.f32.mrf.mxu0
        %v773 = vadd.f32 0.0, %v772
        %774 = vmatmul.f32.gmra.mxu0 %v747
        %v775 = vpop.f32.mrf.mxu0
        %v776 = vadd.f32 0.0, %v775
        %777 = vmatmul.f32.gmra.mxu0 %v750
        %v778 = vpop.f32.mrf.mxu0
        %v779 = vadd.f32 0.0, %v778
        %780 = vdwg.mxu0
        %v782 = vsel %vm694, %v715, 0
        %v785 = vsel %vm694, %v716, 0
        %v788 = vsel %vm694, %v717, 0
        %v791 = vsel %vm694, %v718, 0
        %793 = vmatpush.msra.mxu0 0.0
        %794 = vmatpush.msra.mxu0 0.0
        %795 = vmatpush.msra.mxu0 0.0
        %796 = vmatpush.msra.mxu0 0.0
        %797 = vmatpush.msra.mxu0 0.0
        %798 = vmatpush.msra.mxu0 0.0
        %799 = vmatpush.msra.mxu0 0.0
        %800 = vmatpush.msra.mxu0 0.0
        %801 = vmatpush.msra.mxu0 %v726
        %802 = vmatpush.msra.mxu0 %v725
        %803 = vmatpush.msra.mxu0 %v724
        %804 = vmatpush.msra.mxu0 %v723
        %805 = vmatpush.msra.mxu0 %v722
        %806 = vmatpush.msra.mxu0 %v721
        %807 = vmatpush.msra.mxu0 %v720
        %808 = vmatpush.msra.mxu0 %v719
        %809 = vmatmul.f32.gmra.mxu0 %v782
        %v810 = vpop.f32.mrf.mxu0
        %v811 = vadd.f32 %v770, %v810
        %812 = vmatmul.f32.gmra.mxu0 %v785
        %v813 = vpop.f32.mrf.mxu0
        %v814 = vadd.f32 %v773, %v813
        %815 = vmatmul.f32.gmra.mxu0 %v788
        %v816 = vpop.f32.mrf.mxu0
        %v817 = vadd.f32 %v776, %v816
        %818 = vmatmul.f32.gmra.mxu0 %v791
        %v819 = vpop.f32.mrf.mxu0
        %v820 = vadd.f32 %v779, %v819
        %821 = vdwg.mxu0
        %v822 = vld [vmem:[#allocation2 + $0x2] sm:$0xff]
        %v823 = vld [vmem:[#allocation2 + $0x12] sm:$0xff]
        %v824 = vld [vmem:[#allocation2 + $0x22] sm:$0xff]
        %v825 = vld [vmem:[#allocation2 + $0x32] sm:$0xff]
        %s826 = scalar_lea.vmem %s3, 128
        %v827 = vld [vmem:[%s826] sm:$0xff]
        %v828 = vld [vmem:[%s826 + $0x8] sm:$0xff]
        %v829 = vld [vmem:[%s826 + $0x10] sm:$0xff]
        %v830 = vld [vmem:[%s826 + $0x18] sm:$0xff]
        %v831 = vld [vmem:[%s826 + $0x20] sm:$0xff]
        %v832 = vld [vmem:[%s826 + $0x28] sm:$0xff]
        %v833 = vld [vmem:[%s826 + $0x30] sm:$0xff]
        %v834 = vld [vmem:[%s826 + $0x38] sm:$0xff]
        %v836 = vsel %vm694, %v822, 0
        %v839 = vsel %vm694, %v823, 0
        %v842 = vsel %vm694, %v824, 0
        %v845 = vsel %vm694, %v825, 0
        %847 = vmatpush.msra.mxu0 0.0
        %848 = vmatpush.msra.mxu0 0.0
        %849 = vmatpush.msra.mxu0 0.0
        %850 = vmatpush.msra.mxu0 0.0
        %851 = vmatpush.msra.mxu0 0.0
        %852 = vmatpush.msra.mxu0 0.0
        %853 = vmatpush.msra.mxu0 0.0
        %854 = vmatpush.msra.mxu0 0.0
        %855 = vmatpush.msra.mxu0 %v834
        %856 = vmatpush.msra.mxu0 %v833
        %857 = vmatpush.msra.mxu0 %v832
        %858 = vmatpush.msra.mxu0 %v831
        %859 = vmatpush.msra.mxu0 %v830
        %860 = vmatpush.msra.mxu0 %v829
        %861 = vmatpush.msra.mxu0 %v828
        %862 = vmatpush.msra.mxu0 %v827
        %863 = vmatmul.f32.gmra.mxu0 %v836
        %v864 = vpop.f32.mrf.mxu0
        %v865 = vadd.f32 0.0, %v864
        %866 = vmatmul.f32.gmra.mxu0 %v839
        %v867 = vpop.f32.mrf.mxu0
        %v868 = vadd.f32 0.0, %v867
        %869 = vmatmul.f32.gmra.mxu0 %v842
        %v870 = vpop.f32.mrf.mxu0
        %v871 = vadd.f32 0.0, %v870
        %872 = vmatmul.f32.gmra.mxu0 %v845
        %v873 = vpop.f32.mrf.mxu0
        %v874 = vadd.f32 0.0, %v873
        %875 = vdwg.mxu0
        %v876 = vadd.f32 %v811, %v865
        %v877 = vadd.f32 %v814, %v868
        %v878 = vadd.f32 %v817, %v871
        %v879 = vadd.f32 %v820, %v874
        %v880 = vld [vmem:[%s701] sm:$0xff]
        %v881 = vld [vmem:[%s701 + $0x10] sm:$0xff]
        %v882 = vld [vmem:[%s701 + $0x20] sm:$0xff]
        %v883 = vld [vmem:[%s701 + $0x30] sm:$0xff]
        %s884 = scalar_lea.vmem %s3, 192
        %v885 = vld [vmem:[%s884] sm:$0xff]
        %v886 = vld [vmem:[%s884 + $0x8] sm:$0xff]
        %v887 = vld [vmem:[%s884 + $0x10] sm:$0xff]
        %v888 = vld [vmem:[%s884 + $0x18] sm:$0xff]
        %v889 = vld [vmem:[%s884 + $0x20] sm:$0xff]
        %v890 = vld [vmem:[%s884 + $0x28] sm:$0xff]
        %v891 = vld [vmem:[%s884 + $0x30] sm:$0xff]
        %v892 = vld [vmem:[%s884 + $0x38] sm:$0xff]
        %v894 = vsel %vm694, %v880, 0
        %v897 = vsel %vm694, %v881, 0
        %v900 = vsel %vm694, %v882, 0
        %v903 = vsel %vm694, %v883, 0
        %905 = vmatpush.msra.mxu0 0.0
        %906 = vmatpush.msra.mxu0 0.0
        %907 = vmatpush.msra.mxu0 0.0
        %908 = vmatpush.msra.mxu0 0.0
        %909 = vmatpush.msra.mxu0 0.0
        %910 = vmatpush.msra.mxu0 0.0
        %911 = vmatpush.msra.mxu0 0.0
        %912 = vmatpush.msra.mxu0 0.0
        %913 = vmatpush.msra.mxu0 %v892
        %914 = vmatpush.msra.mxu0 %v891
        %915 = vmatpush.msra.mxu0 %v890
        %916 = vmatpush.msra.mxu0 %v889
        %917 = vmatpush.msra.mxu0 %v888
        %918 = vmatpush.msra.mxu0 %v887
        %919 = vmatpush.msra.mxu0 %v886
        %920 = vmatpush.msra.mxu0 %v885
        %921 = vmatmul.f32.gmra.mxu0 %v894
        %v922 = vpop.f32.mrf.mxu0
        %v923 = vadd.f32 0.0, %v922
        %924 = vmatmul.f32.gmra.mxu0 %v897
        %v925 = vpop.f32.mrf.mxu0
        %v926 = vadd.f32 0.0, %v925
        %927 = vmatmul.f32.gmra.mxu0 %v900
        %v928 = vpop.f32.mrf.mxu0
        %v929 = vadd.f32 0.0, %v928
        %930 = vmatmul.f32.gmra.mxu0 %v903
        %v931 = vpop.f32.mrf.mxu0
        %v932 = vadd.f32 0.0, %v931
        %933 = vdwg.mxu0
        %v934 = vadd.f32 %v876, %v923
        %v935 = vadd.f32 %v877, %v926
        %v936 = vadd.f32 %v878, %v929
        %v937 = vadd.f32 %v879, %v932
        %v938 = vld [vmem:[%s701 + $0x1] sm:$0xff]
        %v939 = vld [vmem:[%s701 + $0x11] sm:$0xff]
        %v940 = vld [vmem:[%s701 + $0x21] sm:$0xff]
        %v941 = vld [vmem:[%s701 + $0x31] sm:$0xff]
        %s942 = scalar_lea.vmem %s3, 256
        %v943 = vld [vmem:[%s942] sm:$0xff]
        %v944 = vld [vmem:[%s942 + $0x8] sm:$0xff]
        %v945 = vld [vmem:[%s942 + $0x10] sm:$0xff]
        %v946 = vld [vmem:[%s942 + $0x18] sm:$0xff]
        %v947 = vld [vmem:[%s942 + $0x20] sm:$0xff]
        %v948 = vld [vmem:[%s942 + $0x28] sm:$0xff]
        %v949 = vld [vmem:[%s942 + $0x30] sm:$0xff]
        %v950 = vld [vmem:[%s942 + $0x38] sm:$0xff]
        %v952 = vsel %vm694, %v938, 0
        %v955 = vsel %vm694, %v939, 0
        %v958 = vsel %vm694, %v940, 0
        %v961 = vsel %vm694, %v941, 0
        %963 = vmatpush.msra.mxu0 0.0
        %964 = vmatpush.msra.mxu0 0.0
        %965 = vmatpush.msra.mxu0 0.0
        %966 = vmatpush.msra.mxu0 0.0
        %967 = vmatpush.msra.mxu0 0.0
        %968 = vmatpush.msra.mxu0 0.0
        %969 = vmatpush.msra.mxu0 0.0
        %970 = vmatpush.msra.mxu0 0.0
        %971 = vmatpush.msra.mxu0 %v950
        %972 = vmatpush.msra.mxu0 %v949
        %973 = vmatpush.msra.mxu0 %v948
        %974 = vmatpush.msra.mxu0 %v947
        %975 = vmatpush.msra.mxu0 %v946
        %976 = vmatpush.msra.mxu0 %v945
        %977 = vmatpush.msra.mxu0 %v944
        %978 = vmatpush.msra.mxu0 %v943
        %979 = vmatmul.f32.gmra.mxu0 %v952
        %v980 = vpop.f32.mrf.mxu0
        %v981 = vadd.f32 0.0, %v980
        %982 = vmatmul.f32.gmra.mxu0 %v955
        %v983 = vpop.f32.mrf.mxu0
        %v984 = vadd.f32 0.0, %v983
        %985 = vmatmul.f32.gmra.mxu0 %v958
        %v986 = vpop.f32.mrf.mxu0
        %v987 = vadd.f32 0.0, %v986
        %988 = vmatmul.f32.gmra.mxu0 %v961
        %v989 = vpop.f32.mrf.mxu0
        %v990 = vadd.f32 0.0, %v989
        %991 = vdwg.mxu0
        %v992 = vadd.f32 %v934, %v981
        %v993 = vadd.f32 %v935, %v984
        %v994 = vadd.f32 %v936, %v987
        %v995 = vadd.f32 %v937, %v990
        %v996 = vld [vmem:[%s701 + $0x2] sm:$0xff]
        %v997 = vld [vmem:[%s701 + $0x12] sm:$0xff]
        %v998 = vld [vmem:[%s701 + $0x22] sm:$0xff]
        %v999 = vld [vmem:[%s701 + $0x32] sm:$0xff]
        %s1000 = scalar_lea.vmem %s3, 320
        %v1001 = vld [vmem:[%s1000] sm:$0xff]
        %v1002 = vld [vmem:[%s1000 + $0x8] sm:$0xff]
        %v1003 = vld [vmem:[%s1000 + $0x10] sm:$0xff]
        %v1004 = vld [vmem:[%s1000 + $0x18] sm:$0xff]
        %v1005 = vld [vmem:[%s1000 + $0x20] sm:$0xff]
        %v1006 = vld [vmem:[%s1000 + $0x28] sm:$0xff]
        %v1007 = vld [vmem:[%s1000 + $0x30] sm:$0xff]
        %v1008 = vld [vmem:[%s1000 + $0x38] sm:$0xff]
        %v1010 = vsel %vm694, %v996, 0
        %v1013 = vsel %vm694, %v997, 0
        %v1016 = vsel %vm694, %v998, 0
        %v1019 = vsel %vm694, %v999, 0
        %1021 = vmatpush.msra.mxu0 0.0
        %1022 = vmatpush.msra.mxu0 0.0
        %1023 = vmatpush.msra.mxu0 0.0
        %1024 = vmatpush.msra.mxu0 0.0
        %1025 = vmatpush.msra.mxu0 0.0
        %1026 = vmatpush.msra.mxu0 0.0
        %1027 = vmatpush.msra.mxu0 0.0
        %1028 = vmatpush.msra.mxu0 0.0
        %1029 = vmatpush.msra.mxu0 %v1008
        %1030 = vmatpush.msra.mxu0 %v1007
        %1031 = vmatpush.msra.mxu0 %v1006
        %1032 = vmatpush.msra.mxu0 %v1005
        %1033 = vmatpush.msra.mxu0 %v1004
        %1034 = vmatpush.msra.mxu0 %v1003
        %1035 = vmatpush.msra.mxu0 %v1002
        %1036 = vmatpush.msra.mxu0 %v1001
        %1037 = vmatmul.f32.gmra.mxu0 %v1010
        %v1038 = vpop.f32.mrf.mxu0
        %v1039 = vadd.f32 0.0, %v1038
        %1040 = vmatmul.f32.gmra.mxu0 %v1013
        %v1041 = vpop.f32.mrf.mxu0
        %v1042 = vadd.f32 0.0, %v1041
        %1043 = vmatmul.f32.gmra.mxu0 %v1016
        %v1044 = vpop.f32.mrf.mxu0
        %v1045 = vadd.f32 0.0, %v1044
        %1046 = vmatmul.f32.gmra.mxu0 %v1019
        %v1047 = vpop.f32.mrf.mxu0
        %v1048 = vadd.f32 0.0, %v1047
        %1049 = vdwg.mxu0
        %v1050 = vadd.f32 %v992, %v1039
        %v1051 = vadd.f32 %v993, %v1042
        %v1052 = vadd.f32 %v994, %v1045
        %v1053 = vadd.f32 %v995, %v1048
        %s1054 = scalar_lea.vmem [#allocation2], 32
        %v1055 = vld [vmem:[%s1054] sm:$0xff]
        %v1056 = vld [vmem:[%s1054 + $0x10] sm:$0xff]
        %v1057 = vld [vmem:[%s1054 + $0x20] sm:$0xff]
        %v1058 = vld [vmem:[%s1054 + $0x30] sm:$0xff]
        %s1059 = scalar_lea.vmem %s3, 384
        %v1060 = vld [vmem:[%s1059] sm:$0xff]
        %v1061 = vld [vmem:[%s1059 + $0x8] sm:$0xff]
        %v1062 = vld [vmem:[%s1059 + $0x10] sm:$0xff]
        %v1063 = vld [vmem:[%s1059 + $0x18] sm:$0xff]
        %v1064 = vld [vmem:[%s1059 + $0x20] sm:$0xff]
        %v1065 = vld [vmem:[%s1059 + $0x28] sm:$0xff]
        %v1066 = vld [vmem:[%s1059 + $0x30] sm:$0xff]
        %v1067 = vld [vmem:[%s1059 + $0x38] sm:$0xff]
        %v1069 = vsel %vm694, %v1055, 0
        %v1072 = vsel %vm694, %v1056, 0
        %v1075 = vsel %vm694, %v1057, 0
        %v1078 = vsel %vm694, %v1058, 0
        %1080 = vmatpush.msra.mxu0 0.0
        %1081 = vmatpush.msra.mxu0 0.0
        %1082 = vmatpush.msra.mxu0 0.0
        %1083 = vmatpush.msra.mxu0 0.0
        %1084 = vmatpush.msra.mxu0 0.0
        %1085 = vmatpush.msra.mxu0 0.0
        %1086 = vmatpush.msra.mxu0 0.0
        %1087 = vmatpush.msra.mxu0 0.0
        %1088 = vmatpush.msra.mxu0 %v1067
        %1089 = vmatpush.msra.mxu0 %v1066
        %1090 = vmatpush.msra.mxu0 %v1065
        %1091 = vmatpush.msra.mxu0 %v1064
        %1092 = vmatpush.msra.mxu0 %v1063
        %1093 = vmatpush.msra.mxu0 %v1062
        %1094 = vmatpush.msra.mxu0 %v1061
        %1095 = vmatpush.msra.mxu0 %v1060
        %1096 = vmatmul.f32.gmra.mxu0 %v1069
        %v1097 = vpop.f32.mrf.mxu0
        %v1098 = vadd.f32 0.0, %v1097
        %1099 = vmatmul.f32.gmra.mxu0 %v1072
        %v1100 = vpop.f32.mrf.mxu0
        %v1101 = vadd.f32 0.0, %v1100
        %1102 = vmatmul.f32.gmra.mxu0 %v1075
        %v1103 = vpop.f32.mrf.mxu0
        %v1104 = vadd.f32 0.0, %v1103
        %1105 = vmatmul.f32.gmra.mxu0 %v1078
        %v1106 = vpop.f32.mrf.mxu0
        %v1107 = vadd.f32 0.0, %v1106
        %1108 = vdwg.mxu0
        %v1109 = vadd.f32 %v1050, %v1098
        %v1110 = vadd.f32 %v1051, %v1101
        %v1111 = vadd.f32 %v1052, %v1104
        %v1112 = vadd.f32 %v1053, %v1107
        %v1113 = vld [vmem:[%s1054 + $0x1] sm:$0xff]
        %v1114 = vld [vmem:[%s1054 + $0x11] sm:$0xff]
        %v1115 = vld [vmem:[%s1054 + $0x21] sm:$0xff]
        %v1116 = vld [vmem:[%s1054 + $0x31] sm:$0xff]
        %s1117 = scalar_lea.vmem %s3, 448
        %v1118 = vld [vmem:[%s1117] sm:$0xff]
        %v1119 = vld [vmem:[%s1117 + $0x8] sm:$0xff]
        %v1120 = vld [vmem:[%s1117 + $0x10] sm:$0xff]
        %v1121 = vld [vmem:[%s1117 + $0x18] sm:$0xff]
        %v1122 = vld [vmem:[%s1117 + $0x20] sm:$0xff]
        %v1123 = vld [vmem:[%s1117 + $0x28] sm:$0xff]
        %v1124 = vld [vmem:[%s1117 + $0x30] sm:$0xff]
        %v1125 = vld [vmem:[%s1117 + $0x38] sm:$0xff]
        %v1127 = vsel %vm694, %v1113, 0
        %v1130 = vsel %vm694, %v1114, 0
        %v1133 = vsel %vm694, %v1115, 0
        %v1136 = vsel %vm694, %v1116, 0
        %1138 = vmatpush.msra.mxu0 0.0
        %1139 = vmatpush.msra.mxu0 0.0
        %1140 = vmatpush.msra.mxu0 0.0
        %1141 = vmatpush.msra.mxu0 0.0
        %1142 = vmatpush.msra.mxu0 0.0
        %1143 = vmatpush.msra.mxu0 0.0
        %1144 = vmatpush.msra.mxu0 0.0
        %1145 = vmatpush.msra.mxu0 0.0
        %1146 = vmatpush.msra.mxu0 %v1125
        %1147 = vmatpush.msra.mxu0 %v1124
        %1148 = vmatpush.msra.mxu0 %v1123
        %1149 = vmatpush.msra.mxu0 %v1122
        %1150 = vmatpush.msra.mxu0 %v1121
        %1151 = vmatpush.msra.mxu0 %v1120
        %1152 = vmatpush.msra.mxu0 %v1119
        %1153 = vmatpush.msra.mxu0 %v1118
        %1154 = vmatmul.f32.gmra.mxu0 %v1127
        %v1155 = vpop.f32.mrf.mxu0
        %v1156 = vadd.f32 0.0, %v1155
        %1157 = vmatmul.f32.gmra.mxu0 %v1130
        %v1158 = vpop.f32.mrf.mxu0
        %v1159 = vadd.f32 0.0, %v1158
        %1160 = vmatmul.f32.gmra.mxu0 %v1133
        %v1161 = vpop.f32.mrf.mxu0
        %v1162 = vadd.f32 0.0, %v1161
        %1163 = vmatmul.f32.gmra.mxu0 %v1136
        %v1164 = vpop.f32.mrf.mxu0
        %v1165 = vadd.f32 0.0, %v1164
        %1166 = vdwg.mxu0
        %v1167 = vadd.f32 %v1109, %v1156
        %v1168 = vadd.f32 %v1110, %v1159
        %v1169 = vadd.f32 %v1111, %v1162
        %v1170 = vadd.f32 %v1112, %v1165
        %v1171 = vld [vmem:[%s1054 + $0x2] sm:$0xff]
        %v1172 = vld [vmem:[%s1054 + $0x12] sm:$0xff]
        %v1173 = vld [vmem:[%s1054 + $0x22] sm:$0xff]
        %v1174 = vld [vmem:[%s1054 + $0x32] sm:$0xff]
        %s1175 = scalar_lea.vmem %s3, 512
        %v1176 = vld [vmem:[%s1175] sm:$0xff]
        %v1177 = vld [vmem:[%s1175 + $0x8] sm:$0xff]
        %v1178 = vld [vmem:[%s1175 + $0x10] sm:$0xff]
        %v1179 = vld [vmem:[%s1175 + $0x18] sm:$0xff]
        %v1180 = vld [vmem:[%s1175 + $0x20] sm:$0xff]
        %v1181 = vld [vmem:[%s1175 + $0x28] sm:$0xff]
        %v1182 = vld [vmem:[%s1175 + $0x30] sm:$0xff]
        %v1183 = vld [vmem:[%s1175 + $0x38] sm:$0xff]
        %v1185 = vsel %vm694, %v1171, 0
        %v1188 = vsel %vm694, %v1172, 0
        %v1191 = vsel %vm694, %v1173, 0
        %v1194 = vsel %vm694, %v1174, 0
        %1196 = vmatpush.msra.mxu0 0.0
        %1197 = vmatpush.msra.mxu0 0.0
        %1198 = vmatpush.msra.mxu0 0.0
        %1199 = vmatpush.msra.mxu0 0.0
        %1200 = vmatpush.msra.mxu0 0.0
        %1201 = vmatpush.msra.mxu0 0.0
        %1202 = vmatpush.msra.mxu0 0.0
        %1203 = vmatpush.msra.mxu0 0.0
        %1204 = vmatpush.msra.mxu0 %v1183
        %1205 = vmatpush.msra.mxu0 %v1182
        %1206 = vmatpush.msra.mxu0 %v1181
        %1207 = vmatpush.msra.mxu0 %v1180
        %1208 = vmatpush.msra.mxu0 %v1179
        %1209 = vmatpush.msra.mxu0 %v1178
        %1210 = vmatpush.msra.mxu0 %v1177
        %1211 = vmatpush.msra.mxu0 %v1176
        %1212 = vmatmul.f32.gmra.mxu0 %v1185
        %v1213 = vpop.f32.mrf.mxu0
        %v1214 = vadd.f32 0.0, %v1213
        %1215 = vmatmul.f32.gmra.mxu0 %v1188
        %v1216 = vpop.f32.mrf.mxu0
        %v1217 = vadd.f32 0.0, %v1216
        %1218 = vmatmul.f32.gmra.mxu0 %v1191
        %v1219 = vpop.f32.mrf.mxu0
        %v1220 = vadd.f32 0.0, %v1219
        %1221 = vmatmul.f32.gmra.mxu0 %v1194
        %v1222 = vpop.f32.mrf.mxu0
        %v1223 = vadd.f32 0.0, %v1222
        %1224 = vdwg.mxu0
        %v1225 = vadd.f32 %v1167, %v1214
        %v1226 = vadd.f32 %v1168, %v1217
        %v1227 = vadd.f32 %v1169, %v1220
        %v1228 = vadd.f32 %v1170, %v1223
        %v1229 = vld [vmem:[%s4] sm:$0x1]
        %v1231 = vperm.slane %v1229, 0
        %v1233 = vadd.f32 %v1225, %v1231
        %v1234 = vadd.f32 %v1226, %v1231
        %v1235 = vadd.f32 %v1227, %v1231
        %v1236 = vadd.f32 %v1228, %v1231
        %v1237 = vmax.f32 %v1233, 0.0
        %v1238 = vmax.f32 %v1234, 0.0
        %v1239 = vmax.f32 %v1235, 0.0
        %v1240 = vmax.f32 %v1236, 0.0
        %v1241 = vld [vmem:[#allocation3] sm:$0xff]
        %v1242 = vld [vmem:[#allocation3 + $0x8] sm:$0xff]
        %v1243 = vld [vmem:[#allocation3 + $0x10] sm:$0xff]
        %v1244 = vld [vmem:[#allocation3 + $0x18] sm:$0xff]
        %v1245 = vld [vmem:[#allocation3 + $0x20] sm:$0xff]
        %v1246 = vld [vmem:[#allocation3 + $0x28] sm:$0xff]
        %v1247 = vld [vmem:[#allocation3 + $0x30] sm:$0xff]
        %v1248 = vld [vmem:[#allocation3 + $0x38] sm:$0xff]
        %v1249 = vld [vmem:[#allocation3 + $0x40] sm:$0xff]
        %v1250 = vld [vmem:[#allocation3 + $0x48] sm:$0xff]
        %v1251 = vld [vmem:[#allocation3 + $0x50] sm:$0xff]
        %v1252 = vld [vmem:[#allocation3 + $0x58] sm:$0xff]
        %v1253 = vld [vmem:[#allocation3 + $0x60] sm:$0xff]
        %v1254 = vld [vmem:[#allocation3 + $0x68] sm:$0xff]
        %v1255 = vld [vmem:[#allocation3 + $0x70] sm:$0xff]
        %v1256 = vld [vmem:[#allocation3 + $0x78] sm:$0xff]
        %v1257 = vld [vmem:[#allocation3 + $0x80] sm:$0xff]
        %v1258 = vld [vmem:[#allocation3 + $0x88] sm:$0xff]
        %v1259 = vld [vmem:[#allocation3 + $0x90] sm:$0xff]
        %v1260 = vld [vmem:[#allocation3 + $0x98] sm:$0xff]
        %v1261 = vld [vmem:[#allocation3 + $0xa0] sm:$0xff]
        %v1262 = vld [vmem:[#allocation3 + $0xa8] sm:$0xff]
        %v1263 = vld [vmem:[#allocation3 + $0xb0] sm:$0xff]
        %v1264 = vld [vmem:[#allocation3 + $0xb8] sm:$0xff]
        %v1265 = vld [vmem:[#allocation3 + $0xc0] sm:$0xff]
        %v1266 = vld [vmem:[#allocation3 + $0xc8] sm:$0xff]
        %v1267 = vld [vmem:[#allocation3 + $0xd0] sm:$0xff]
        %v1268 = vld [vmem:[#allocation3 + $0xd8] sm:$0xff]
        %v1269 = vld [vmem:[#allocation3 + $0xe0] sm:$0xff]
        %v1270 = vld [vmem:[#allocation3 + $0xe8] sm:$0xff]
        %v1271 = vld [vmem:[#allocation3 + $0xf0] sm:$0xff]
        %v1272 = vld [vmem:[#allocation3 + $0xf8] sm:$0xff]
        %v1273 = vld [vmem:[#allocation3 + $0x100] sm:$0xff]
        %v1274 = vld [vmem:[#allocation3 + $0x108] sm:$0xff]
        %v1275 = vld [vmem:[#allocation3 + $0x110] sm:$0xff]
        %v1276 = vld [vmem:[#allocation3 + $0x118] sm:$0xff]
        %v1277 = vld [vmem:[#allocation3 + $0x120] sm:$0xff]
        %v1278 = vld [vmem:[#allocation3 + $0x128] sm:$0xff]
        %v1279 = vld [vmem:[#allocation3 + $0x130] sm:$0xff]
        %v1280 = vld [vmem:[#allocation3 + $0x138] sm:$0xff]
        %v1281 = vld [vmem:[#allocation3 + $0x140] sm:$0xff]
        %v1282 = vld [vmem:[#allocation3 + $0x148] sm:$0xff]
        %v1283 = vld [vmem:[#allocation3 + $0x150] sm:$0xff]
        %v1284 = vld [vmem:[#allocation3 + $0x158] sm:$0xff]
        %v1285 = vld [vmem:[#allocation3 + $0x160] sm:$0xff]
        %v1286 = vld [vmem:[#allocation3 + $0x168] sm:$0xff]
        %v1287 = vld [vmem:[#allocation3 + $0x170] sm:$0xff]
        %v1288 = vld [vmem:[#allocation3 + $0x178] sm:$0xff]
        %v1289 = vld [vmem:[#allocation3 + $0x180] sm:$0xff]
        %v1290 = vld [vmem:[#allocation3 + $0x188] sm:$0xff]
        %v1291 = vld [vmem:[#allocation3 + $0x190] sm:$0xff]
        %v1292 = vld [vmem:[#allocation3 + $0x198] sm:$0xff]
        %v1293 = vld [vmem:[#allocation3 + $0x1a0] sm:$0xff]
        %v1294 = vld [vmem:[#allocation3 + $0x1a8] sm:$0xff]
        %v1295 = vld [vmem:[#allocation3 + $0x1b0] sm:$0xff]
        %v1296 = vld [vmem:[#allocation3 + $0x1b8] sm:$0xff]
        %v1297 = vld [vmem:[#allocation3 + $0x1c0] sm:$0xff]
        %v1298 = vld [vmem:[#allocation3 + $0x1c8] sm:$0xff]
        %v1299 = vld [vmem:[#allocation3 + $0x1d0] sm:$0xff]
        %v1300 = vld [vmem:[#allocation3 + $0x1d8] sm:$0xff]
        %v1301 = vld [vmem:[#allocation3 + $0x1e0] sm:$0xff]
        %v1302 = vld [vmem:[#allocation3 + $0x1e8] sm:$0xff]
        %v1303 = vld [vmem:[#allocation3 + $0x1f0] sm:$0xff]
        %v1304 = vld [vmem:[#allocation3 + $0x1f8] sm:$0xff]
        %v1305 = vld [vmem:[%s6] sm:$0xff]
        %v1307 = vperm.slane %v1305, 0
        %v1308 = vperm.slane %v1305, 1
        %v1309 = vperm.slane %v1305, 2
        %v1310 = vperm.slane %v1305, 3
        %v1311 = vperm.slane %v1305, 4
        %v1312 = vperm.slane %v1305, 5
        %v1313 = vperm.slane %v1305, 6
        %v1314 = vperm.slane %v1305, 7
        %v1324 = vsel %vm694, %v1237, 0
        %v1327 = vsel %vm694, %v1238, 0
        %v1330 = vsel %vm694, %v1239, 0
        %v1333 = vsel %vm694, %v1240, 0
        %1335 = vmatpush.msra.mxu0 0.0
        %1336 = vmatpush.msra.mxu0 0.0
        %1337 = vmatpush.msra.mxu0 0.0
        %1338 = vmatpush.msra.mxu0 0.0
        %1339 = vmatpush.msra.mxu0 0.0
        %1340 = vmatpush.msra.mxu0 0.0
        %1341 = vmatpush.msra.mxu0 0.0
        %1342 = vmatpush.msra.mxu0 0.0
        %1343 = vmatpush.msra.mxu0 %v1297
        %1344 = vmatpush.msra.mxu0 %v1289
        %1345 = vmatpush.msra.mxu0 %v1281
        %1346 = vmatpush.msra.mxu0 %v1273
        %1347 = vmatpush.msra.mxu0 %v1265
        %1348 = vmatpush.msra.mxu0 %v1257
        %1349 = vmatpush.msra.mxu0 %v1249
        %1350 = vmatpush.msra.mxu0 %v1241
        %1351 = vmatmul.f32.gmra.mxu0 %v1324
        %v1352 = vpop.f32.mrf.mxu0
        %v1353 = vadd.f32 %v1307, %v1352
        %1354 = vmatmul.f32.gmra.mxu0 %v1327
        %v1355 = vpop.f32.mrf.mxu0
        %v1356 = vadd.f32 %v1307, %v1355
        %1357 = vmatmul.f32.gmra.mxu0 %v1330
        %v1358 = vpop.f32.mrf.mxu0
        %v1359 = vadd.f32 %v1307, %v1358
        %1360 = vmatmul.f32.gmra.mxu0 %v1333
        %v1361 = vpop.f32.mrf.mxu0
        %v1362 = vadd.f32 %v1307, %v1361
        %1363 = vdwg.mxu0
        %1364 = vmatpush.msra.mxu0 0.0
        %1365 = vmatpush.msra.mxu0 0.0
        %1366 = vmatpush.msra.mxu0 0.0
        %1367 = vmatpush.msra.mxu0 0.0
        %1368 = vmatpush.msra.mxu0 0.0
        %1369 = vmatpush.msra.mxu0 0.0
        %1370 = vmatpush.msra.mxu0 0.0
        %1371 = vmatpush.msra.mxu0 0.0
        %1372 = vmatpush.msra.mxu0 %v1298
        %1373 = vmatpush.msra.mxu0 %v1290
        %1374 = vmatpush.msra.mxu0 %v1282
        %1375 = vmatpush.msra.mxu0 %v1274
        %1376 = vmatpush.msra.mxu0 %v1266
        %1377 = vmatpush.msra.mxu0 %v1258
        %1378 = vmatpush.msra.mxu0 %v1250
        %1379 = vmatpush.msra.mxu0 %v1242
        %1380 = vmatmul.f32.gmra.mxu0 %v1324
        %v1381 = vpop.f32.mrf.mxu0
        %v1382 = vadd.f32 %v1308, %v1381
        %1383 = vmatmul.f32.gmra.mxu0 %v1327
        %v1384 = vpop.f32.mrf.mxu0
        %v1385 = vadd.f32 %v1308, %v1384
        %1386 = vmatmul.f32.gmra.mxu0 %v1330
        %v1387 = vpop.f32.mrf.mxu0
        %v1388 = vadd.f32 %v1308, %v1387
        %1389 = vmatmul.f32.gmra.mxu0 %v1333
        %v1390 = vpop.f32.mrf.mxu0
        %v1391 = vadd.f32 %v1308, %v1390
        %1392 = vdwg.mxu0
        %1393 = vmatpush.msra.mxu0 0.0
        %1394 = vmatpush.msra.mxu0 0.0
        %1395 = vmatpush.msra.mxu0 0.0
        %1396 = vmatpush.msra.mxu0 0.0
        %1397 = vmatpush.msra.mxu0 0.0
        %1398 = vmatpush.msra.mxu0 0.0
        %1399 = vmatpush.msra.mxu0 0.0
        %1400 = vmatpush.msra.mxu0 0.0
        %1401 = vmatpush.msra.mxu0 %v1299
        %1402 = vmatpush.msra.mxu0 %v1291
        %1403 = vmatpush.msra.mxu0 %v1283
        %1404 = vmatpush.msra.mxu0 %v1275
        %1405 = vmatpush.msra.mxu0 %v1267
        %1406 = vmatpush.msra.mxu0 %v1259
        %1407 = vmatpush.msra.mxu0 %v1251
        %1408 = vmatpush.msra.mxu0 %v1243
        %1409 = vmatmul.f32.gmra.mxu0 %v1324
        %v1410 = vpop.f32.mrf.mxu0
        %v1411 = vadd.f32 %v1309, %v1410
        %1412 = vmatmul.f32.gmra.mxu0 %v1327
        %v1413 = vpop.f32.mrf.mxu0
        %v1414 = vadd.f32 %v1309, %v1413
        %1415 = vmatmul.f32.gmra.mxu0 %v1330
        %v1416 = vpop.f32.mrf.mxu0
        %v1417 = vadd.f32 %v1309, %v1416
        %1418 = vmatmul.f32.gmra.mxu0 %v1333
        %v1419 = vpop.f32.mrf.mxu0
        %v1420 = vadd.f32 %v1309, %v1419
        %1421 = vdwg.mxu0
        %1422 = vmatpush.msra.mxu0 0.0
        %1423 = vmatpush.msra.mxu0 0.0
        %1424 = vmatpush.msra.mxu0 0.0
        %1425 = vmatpush.msra.mxu0 0.0
        %1426 = vmatpush.msra.mxu0 0.0
        %1427 = vmatpush.msra.mxu0 0.0
        %1428 = vmatpush.msra.mxu0 0.0
        %1429 = vmatpush.msra.mxu0 0.0
        %1430 = vmatpush.msra.mxu0 %v1300
        %1431 = vmatpush.msra.mxu0 %v1292
        %1432 = vmatpush.msra.mxu0 %v1284
        %1433 = vmatpush.msra.mxu0 %v1276
        %1434 = vmatpush.msra.mxu0 %v1268
        %1435 = vmatpush.msra.mxu0 %v1260
        %1436 = vmatpush.msra.mxu0 %v1252
        %1437 = vmatpush.msra.mxu0 %v1244
        %1438 = vmatmul.f32.gmra.mxu0 %v1324
        %v1439 = vpop.f32.mrf.mxu0
        %v1440 = vadd.f32 %v1310, %v1439
        %1441 = vmatmul.f32.gmra.mxu0 %v1327
        %v1442 = vpop.f32.mrf.mxu0
        %v1443 = vadd.f32 %v1310, %v1442
        %1444 = vmatmul.f32.gmra.mxu0 %v1330
        %v1445 = vpop.f32.mrf.mxu0
        %v1446 = vadd.f32 %v1310, %v1445
        %1447 = vmatmul.f32.gmra.mxu0 %v1333
        %v1448 = vpop.f32.mrf.mxu0
        %v1449 = vadd.f32 %v1310, %v1448
        %1450 = vdwg.mxu0
        %1451 = vmatpush.msra.mxu0 0.0
        %1452 = vmatpush.msra.mxu0 0.0
        %1453 = vmatpush.msra.mxu0 0.0
        %1454 = vmatpush.msra.mxu0 0.0
        %1455 = vmatpush.msra.mxu0 0.0
        %1456 = vmatpush.msra.mxu0 0.0
        %1457 = vmatpush.msra.mxu0 0.0
        %1458 = vmatpush.msra.mxu0 0.0
        %1459 = vmatpush.msra.mxu0 %v1301
        %1460 = vmatpush.msra.mxu0 %v1293
        %1461 = vmatpush.msra.mxu0 %v1285
        %1462 = vmatpush.msra.mxu0 %v1277
        %1463 = vmatpush.msra.mxu0 %v1269
        %1464 = vmatpush.msra.mxu0 %v1261
        %1465 = vmatpush.msra.mxu0 %v1253
        %1466 = vmatpush.msra.mxu0 %v1245
        %1467 = vmatmul.f32.gmra.mxu0 %v1324
        %v1468 = vpop.f32.mrf.mxu0
        %v1469 = vadd.f32 %v1311, %v1468
        %1470 = vmatmul.f32.gmra.mxu0 %v1327
        %v1471 = vpop.f32.mrf.mxu0
        %v1472 = vadd.f32 %v1311, %v1471
        %1473 = vmatmul.f32.gmra.mxu0 %v1330
        %v1474 = vpop.f32.mrf.mxu0
        %v1475 = vadd.f32 %v1311, %v1474
        %1476 = vmatmul.f32.gmra.mxu0 %v1333
        %v1477 = vpop.f32.mrf.mxu0
        %v1478 = vadd.f32 %v1311, %v1477
        %1479 = vdwg.mxu0
        %1480 = vmatpush.msra.mxu0 0.0
        %1481 = vmatpush.msra.mxu0 0.0
        %1482 = vmatpush.msra.mxu0 0.0
        %1483 = vmatpush.msra.mxu0 0.0
        %1484 = vmatpush.msra.mxu0 0.0
        %1485 = vmatpush.msra.mxu0 0.0
        %1486 = vmatpush.msra.mxu0 0.0
        %1487 = vmatpush.msra.mxu0 0.0
        %1488 = vmatpush.msra.mxu0 %v1302
        %1489 = vmatpush.msra.mxu0 %v1294
        %1490 = vmatpush.msra.mxu0 %v1286
        %1491 = vmatpush.msra.mxu0 %v1278
        %1492 = vmatpush.msra.mxu0 %v1270
        %1493 = vmatpush.msra.mxu0 %v1262
        %1494 = vmatpush.msra.mxu0 %v1254
        %1495 = vmatpush.msra.mxu0 %v1246
        %1496 = vmatmul.f32.gmra.mxu0 %v1324
        %v1497 = vpop.f32.mrf.mxu0
        %v1498 = vadd.f32 %v1312, %v1497
        %1499 = vmatmul.f32.gmra.mxu0 %v1327
        %v1500 = vpop.f32.mrf.mxu0
        %v1501 = vadd.f32 %v1312, %v1500
        %1502 = vmatmul.f32.gmra.mxu0 %v1330
        %v1503 = vpop.f32.mrf.mxu0
        %v1504 = vadd.f32 %v1312, %v1503
        %1505 = vmatmul.f32.gmra.mxu0 %v1333
        %v1506 = vpop.f32.mrf.mxu0
        %v1507 = vadd.f32 %v1312, %v1506
        %1508 = vdwg.mxu0
        %1509 = vmatpush.msra.mxu0 0.0
        %1510 = vmatpush.msra.mxu0 0.0
        %1511 = vmatpush.msra.mxu0 0.0
        %1512 = vmatpush.msra.mxu0 0.0
        %1513 = vmatpush.msra.mxu0 0.0
        %1514 = vmatpush.msra.mxu0 0.0
        %1515 = vmatpush.msra.mxu0 0.0
        %1516 = vmatpush.msra.mxu0 0.0
        %1517 = vmatpush.msra.mxu0 %v1303
        %1518 = vmatpush.msra.mxu0 %v1295
        %1519 = vmatpush.msra.mxu0 %v1287
        %1520 = vmatpush.msra.mxu0 %v1279
        %1521 = vmatpush.msra.mxu0 %v1271
        %1522 = vmatpush.msra.mxu0 %v1263
        %1523 = vmatpush.msra.mxu0 %v1255
        %1524 = vmatpush.msra.mxu0 %v1247
        %1525 = vmatmul.f32.gmra.mxu0 %v1324
        %v1526 = vpop.f32.mrf.mxu0
        %v1527 = vadd.f32 %v1313, %v1526
        %1528 = vmatmul.f32.gmra.mxu0 %v1327
        %v1529 = vpop.f32.mrf.mxu0
        %v1530 = vadd.f32 %v1313, %v1529
        %1531 = vmatmul.f32.gmra.mxu0 %v1330
        %v1532 = vpop.f32.mrf.mxu0
        %v1533 = vadd.f32 %v1313, %v1532
        %1534 = vmatmul.f32.gmra.mxu0 %v1333
        %v1535 = vpop.f32.mrf.mxu0
        %v1536 = vadd.f32 %v1313, %v1535
        %1537 = vdwg.mxu0
        %1538 = vmatpush.msra.mxu0 0.0
        %1539 = vmatpush.msra.mxu0 0.0
        %1540 = vmatpush.msra.mxu0 0.0
        %1541 = vmatpush.msra.mxu0 0.0
        %1542 = vmatpush.msra.mxu0 0.0
        %1543 = vmatpush.msra.mxu0 0.0
        %1544 = vmatpush.msra.mxu0 0.0
        %1545 = vmatpush.msra.mxu0 0.0
        %1546 = vmatpush.msra.mxu0 %v1304
        %1547 = vmatpush.msra.mxu0 %v1296
        %1548 = vmatpush.msra.mxu0 %v1288
        %1549 = vmatpush.msra.mxu0 %v1280
        %1550 = vmatpush.msra.mxu0 %v1272
        %1551 = vmatpush.msra.mxu0 %v1264
        %1552 = vmatpush.msra.mxu0 %v1256
        %1553 = vmatpush.msra.mxu0 %v1248
        %1554 = vmatmul.f32.gmra.mxu0 %v1324
        %v1555 = vpop.f32.mrf.mxu0
        %v1556 = vadd.f32 %v1314, %v1555
        %1557 = vmatmul.f32.gmra.mxu0 %v1327
        %v1558 = vpop.f32.mrf.mxu0
        %v1559 = vadd.f32 %v1314, %v1558
        %1560 = vmatmul.f32.gmra.mxu0 %v1330
        %v1561 = vpop.f32.mrf.mxu0
        %v1562 = vadd.f32 %v1314, %v1561
        %1563 = vmatmul.f32.gmra.mxu0 %v1333
        %v1564 = vpop.f32.mrf.mxu0
        %v1565 = vadd.f32 %v1314, %v1564
        %1566 = vdwg.mxu0
        %v1567 = vld [vmem:[%s293] sm:$0xff]
        %v1568 = vld [vmem:[%s293 + $0x8] sm:$0xff]
        %v1569 = vld [vmem:[%s293 + $0x10] sm:$0xff]
        %v1570 = vld [vmem:[%s293 + $0x18] sm:$0xff]
        %v1571 = vld [vmem:[%s293 + $0x20] sm:$0xff]
        %v1572 = vld [vmem:[%s293 + $0x28] sm:$0xff]
        %v1573 = vld [vmem:[%s293 + $0x30] sm:$0xff]
        %v1574 = vld [vmem:[%s293 + $0x38] sm:$0xff]
        %v1575 = vld [vmem:[%s293 + $0x40] sm:$0xff]
        %v1576 = vld [vmem:[%s293 + $0x48] sm:$0xff]
        %v1577 = vld [vmem:[%s293 + $0x50] sm:$0xff]
        %v1578 = vld [vmem:[%s293 + $0x58] sm:$0xff]
        %v1579 = vld [vmem:[%s293 + $0x60] sm:$0xff]
        %v1580 = vld [vmem:[%s293 + $0x68] sm:$0xff]
        %v1581 = vld [vmem:[%s293 + $0x70] sm:$0xff]
        %v1582 = vld [vmem:[%s293 + $0x78] sm:$0xff]
        %v1583 = vld [vmem:[%s293 + $0x80] sm:$0xff]
        %v1584 = vld [vmem:[%s293 + $0x88] sm:$0xff]
        %v1585 = vld [vmem:[%s293 + $0x90] sm:$0xff]
        %v1586 = vld [vmem:[%s293 + $0x98] sm:$0xff]
        %v1587 = vld [vmem:[%s293 + $0xa0] sm:$0xff]
        %v1588 = vld [vmem:[%s293 + $0xa8] sm:$0xff]
        %v1589 = vld [vmem:[%s293 + $0xb0] sm:$0xff]
        %v1590 = vld [vmem:[%s293 + $0xb8] sm:$0xff]
        %v1591 = vld [vmem:[%s293 + $0xc0] sm:$0xff]
        %v1592 = vld [vmem:[%s293 + $0xc8] sm:$0xff]
        %v1593 = vld [vmem:[%s293 + $0xd0] sm:$0xff]
        %v1594 = vld [vmem:[%s293 + $0xd8] sm:$0xff]
        %v1595 = vld [vmem:[%s293 + $0xe0] sm:$0xff]
        %v1596 = vld [vmem:[%s293 + $0xe8] sm:$0xff]
        %v1597 = vld [vmem:[%s293 + $0xf0] sm:$0xff]
        %v1598 = vld [vmem:[%s293 + $0xf8] sm:$0xff]
        %v1599 = vadd.f32 %v1353, %v1567
        %v1600 = vadd.f32 %v1382, %v1568
        %v1601 = vadd.f32 %v1411, %v1569
        %v1602 = vadd.f32 %v1440, %v1570
        %v1603 = vadd.f32 %v1469, %v1571
        %v1604 = vadd.f32 %v1498, %v1572
        %v1605 = vadd.f32 %v1527, %v1573
        %v1606 = vadd.f32 %v1556, %v1574
        %v1607 = vadd.f32 %v1356, %v1575
        %v1608 = vadd.f32 %v1385, %v1576
        %v1609 = vadd.f32 %v1414, %v1577
        %v1610 = vadd.f32 %v1443, %v1578
        %v1611 = vadd.f32 %v1472, %v1579
        %v1612 = vadd.f32 %v1501, %v1580
        %v1613 = vadd.f32 %v1530, %v1581
        %v1614 = vadd.f32 %v1559, %v1582
        %v1615 = vadd.f32 %v1359, %v1583
        %v1616 = vadd.f32 %v1388, %v1584
        %v1617 = vadd.f32 %v1417, %v1585
        %v1618 = vadd.f32 %v1446, %v1586
        %v1619 = vadd.f32 %v1475, %v1587
        %v1620 = vadd.f32 %v1504, %v1588
        %v1621 = vadd.f32 %v1533, %v1589
        %v1622 = vadd.f32 %v1562, %v1590
        %v1623 = vadd.f32 %v1362, %v1591
        %v1624 = vadd.f32 %v1391, %v1592
        %v1625 = vadd.f32 %v1420, %v1593
        %v1626 = vadd.f32 %v1449, %v1594
        %v1627 = vadd.f32 %v1478, %v1595
        %v1628 = vadd.f32 %v1507, %v1596
        %v1629 = vadd.f32 %v1536, %v1597
        %v1630 = vadd.f32 %v1565, %v1598
        %v1631 = vmax.f32 %v1599, 0.0
        %v1632 = vmax.f32 %v1600, 0.0
        %v1633 = vmax.f32 %v1601, 0.0
        %v1634 = vmax.f32 %v1602, 0.0
        %v1635 = vmax.f32 %v1603, 0.0
        %v1636 = vmax.f32 %v1604, 0.0
        %v1637 = vmax.f32 %v1605, 0.0
        %v1638 = vmax.f32 %v1606, 0.0
        %v1639 = vmax.f32 %v1607, 0.0
        %v1640 = vmax.f32 %v1608, 0.0
        %v1641 = vmax.f32 %v1609, 0.0
        %v1642 = vmax.f32 %v1610, 0.0
        %v1643 = vmax.f32 %v1611, 0.0
        %v1644 = vmax.f32 %v1612, 0.0
        %v1645 = vmax.f32 %v1613, 0.0
        %v1646 = vmax.f32 %v1614, 0.0
        %v1647 = vmax.f32 %v1615, 0.0
        %v1648 = vmax.f32 %v1616, 0.0
        %v1649 = vmax.f32 %v1617, 0.0
        %v1650 = vmax.f32 %v1618, 0.0
        %v1651 = vmax.f32 %v1619, 0.0
        %v1652 = vmax.f32 %v1620, 0.0
        %v1653 = vmax.f32 %v1621, 0.0
        %v1654 = vmax.f32 %v1622, 0.0
        %v1655 = vmax.f32 %v1623, 0.0
        %v1656 = vmax.f32 %v1624, 0.0
        %v1657 = vmax.f32 %v1625, 0.0
        %v1658 = vmax.f32 %v1626, 0.0
        %v1659 = vmax.f32 %v1627, 0.0
        %v1660 = vmax.f32 %v1628, 0.0
        %v1661 = vmax.f32 %v1629, 0.0
        %v1662 = vmax.f32 %v1630, 0.0
        %1663 = vst [vmem:[%s288] sm:$0xff] %v1631
        %1664 = vst [vmem:[%s288 + $0x8] sm:$0xff] %v1632
        %1665 = vst [vmem:[%s288 + $0x10] sm:$0xff] %v1633
        %1666 = vst [vmem:[%s288 + $0x18] sm:$0xff] %v1634
        %1667 = vst [vmem:[%s288 + $0x20] sm:$0xff] %v1635
        %1668 = vst [vmem:[%s288 + $0x28] sm:$0xff] %v1636
        %1669 = vst [vmem:[%s288 + $0x30] sm:$0xff] %v1637
        %1670 = vst [vmem:[%s288 + $0x38] sm:$0xff] %v1638
        %1671 = vst [vmem:[%s288 + $0x40] sm:$0xff] %v1639
        %1672 = vst [vmem:[%s288 + $0x48] sm:$0xff] %v1640
        %1673 = vst [vmem:[%s288 + $0x50] sm:$0xff] %v1641
        %1674 = vst [vmem:[%s288 + $0x58] sm:$0xff] %v1642
        %1675 = vst [vmem:[%s288 + $0x60] sm:$0xff] %v1643
        %1676 = vst [vmem:[%s288 + $0x68] sm:$0xff] %v1644
        %1677 = vst [vmem:[%s288 + $0x70] sm:$0xff] %v1645
        %1678 = vst [vmem:[%s288 + $0x78] sm:$0xff] %v1646
        %1679 = vst [vmem:[%s288 + $0x80] sm:$0xff] %v1647
        %1680 = vst [vmem:[%s288 + $0x88] sm:$0xff] %v1648
        %1681 = vst [vmem:[%s288 + $0x90] sm:$0xff] %v1649
        %1682 = vst [vmem:[%s288 + $0x98] sm:$0xff] %v1650
        %1683 = vst [vmem:[%s288 + $0xa0] sm:$0xff] %v1651
        %1684 = vst [vmem:[%s288 + $0xa8] sm:$0xff] %v1652
        %1685 = vst [vmem:[%s288 + $0xb0] sm:$0xff] %v1653
        %1686 = vst [vmem:[%s288 + $0xb8] sm:$0xff] %v1654
        %1687 = vst [vmem:[%s288 + $0xc0] sm:$0xff] %v1655
        %1688 = vst [vmem:[%s288 + $0xc8] sm:$0xff] %v1656
        %1689 = vst [vmem:[%s288 + $0xd0] sm:$0xff] %v1657
        %1690 = vst [vmem:[%s288 + $0xd8] sm:$0xff] %v1658
        %1691 = vst [vmem:[%s288 + $0xe0] sm:$0xff] %v1659
        %1692 = vst [vmem:[%s288 + $0xe8] sm:$0xff] %v1660
        %1693 = vst [vmem:[%s288 + $0xf0] sm:$0xff] %v1661
        %1694 = vst [vmem:[%s288 + $0xf8] sm:$0xff] %v1662
        %s1695 = sand.u32 %s182, 1
        %s1696 = scalar_lea.sflag [#allocation5], %s1695
        %s1697 = sand.u32 %s182, 1
        %s1698 = smul.addr %s1697, 256
        %s1699 = scalar_lea.vmem [#allocation6], %s1698
        // Predicated region
        $region53: #{tpu_custom_call.1} parent=47 // pred_check
          %p1700 = pneg %p192
        $region54: #{tpu_custom_call.1} parent=47 // pred_check_branch
          %1702 = sbr.rel (%p1700) target = $region56
        $region55: #{tpu_custom_call.1} parent=47 // pred_region
          %1704 = vsyncadd %s1696, 0
          %s1705 = smul.addr %s22, 32
          %s1706 = smul.addr %s1705, 8
          %s1707 = scalar_lea.hbm %s7, %s1706
          %s1708 = sshll.u32 %s1699, 4
          %s1709 = int_to_ptr.vmem [resolvable:$true] %s1708
          %s1710 = sshll.u32 %s1707, 4
          %s1711 = int_to_ptr.hbm [resolvable:$true] %s1710
          %1716 = dma.vmem_to_hbm [thread:$0]  %s1709, 4096, %s1711, %s1696, 1024, 1024, 64
        $region56: #{tpu_custom_call.1} parent=47 // pred_fallthru
          _
      $region48: #{tpu_custom_call.1} parent=5 // pred_fallthru
        _
      %p1717 = scmp.le.s32.totalorder 2, %s17
      // Predicated region
      $region57: #{tpu_custom_call.1} parent=5 // pred_check
        %p1718 = pneg %p1717
      $region58: #{tpu_custom_call.1} parent=5 // pred_check_branch
        %1720 = sbr.rel (%p1718) target = $region60
      $region59: #{tpu_custom_call.1} parent=5 // pred_region
        %s1721 = ssub.s32 %s17, 2
        // Predicated region
        $region61: #{tpu_custom_call.1} parent=59 // pred_check
          %p1722 = pneg %p198
        $region62: #{tpu_custom_call.1} parent=59 // pred_check_branch
          %1724 = sbr.rel (%p1722) target = $region64
        $region63: #{tpu_custom_call.1} parent=59 // pred_region
          %s1725 = sand.u32 %s183, 1
          %s1726 = scalar_lea.sflag [#allocation5], %s1725
          %s1727 = sand.u32 %s183, 1
          %s1728 = smul.addr %s1727, 256
          %s1729 = scalar_lea.vmem [#allocation6], %s1728
          %1731 = dma.done %s1726, 4096
        $region64: #{tpu_custom_call.1} parent=59 // pred_fallthru
          _
      $region60: #{tpu_custom_call.1} parent=5 // pred_fallthru
        _
    $region6: #{tpu_custom_call.1} parent=1 // loop_footer
      %s21 = sadd.s32 1, %s17
    $region7: #{tpu_custom_call.1} parent=1 // loop_footer_branch
      %16 = sbr.rel target = $region3
    $region8: #{tpu_custom_call.1} parent=1 // loop_exit
      _
    %1732 = vsyncpa [#allocation4], 1
    %s1733 = scalar_lea.sflag [#allocation4], 1
    %1734 = vsyncpa %s1733, 1
    %1735 = vsyncpa [#allocation5], 1
    %s1736 = scalar_lea.sflag [#allocation5], 1
    %1737 = vsyncpa %s1736, 1

</llo_original>
